<compile_context>
chip_gen: v7x
topology: tpu7x:2x2x1
jax: 0.10.0
libtpu: 0.0.40
codegen_flags: <defaults>
</compile_context>

<pallas_src>
import functools

import jax
import jax.numpy as jnp
from jax import lax
from jax.experimental import pallas as pl
from jax.experimental.pallas import tpu as pltpu


def _round_up(x, m):
    return ((x + m - 1) // m) * m


def _cdiv(a, b):
    return -(-a // b)


def _num_tensorcores():
    """Best-effort: 2 on v7x (2 TC/chip), else 1."""
    try:
        kind = jax.devices()[0].device_kind.lower()
    except Exception:
        return 1
    return 2 if "v7" in kind else 1


def _vmem_limit_bytes(resident_bytes):
    """~2x resident + headroom, capped at 0.75 * physical VMEM."""
    phys = 64 << 20                      # conservative fallback (v7x per-TC)
    try:
        v = int(getattr(pltpu.get_tpu_info(), "vmem_capacity_bytes", 0))
        if v >= (32 << 20):
            phys = v
    except Exception:
        pass
    want = max(int(2 * resident_bytes) + (8 << 20), 32 << 20)
    return int(min(want, int(phys * 0.75)))


def _sigmoid(z):
    # 1/(1+exp(-z)); exp and approx reciprocal both use the EUP slot, keeping
    # the recurrent serial chain off a VALU divide.
    return pl.reciprocal(1.0 + jnp.exp(-z), approx=True)


def lstm_kernel(xg_ref, whh_ref, wfc_ref, bfc_ref, out_ref, h_ref, c_ref,
                *, hidden_pad, time_block, seq_len, mask_tail, unroll):
    """One grid step = `time_block` LSTM steps for one batch block.

    Grid = (batch_blocks [parallel, v7x only], time_blocks [arbitrary]).

    xg_ref  : (TT, BB, 4*Hp) f32  precomputed x @ W_ih^T + bias (gate blocks
                                  (i, f, o, g), each Hp-wide / lane aligned)
    whh_ref : (Hp, 4*Hp)     bf16 recurrent weight, resident in VMEM
    wfc_ref : (Hp, OP)       bf16 final Linear weight^T, zero-padded
    bfc_ref : (1, OP)        f32  final Linear bias, zero-padded
    out_ref : (BB, OP)       f32  sigmoid(fc(h_T)), written on last time block
    h_ref, c_ref : (BB, Hp)  f32  VMEM scratch carrying recurrent state
    """
    Hp = hidden_pad
    t_blk = pl.program_id(1)

    @pl.when(t_blk == 0)
    def _init():
        h_ref[...] = jnp.zeros_like(h_ref)
        c_ref[...] = jnp.zeros_like(c_ref)

    # Loop-invariant weight load hoisted out of the time loop.
    W_hh = whh_ref[...]                                    # (Hp, 4Hp) bf16

    def step(tt, carry):
        h, c = carry
        # Recurrent projection only; x-projection + bias were precomputed.
        gates = xg_ref[tt] + jnp.dot(h.astype(jnp.bfloat16), W_hh,
                                     preferred_element_type=jnp.float32)
        sig = _sigmoid(gates[:, :3 * Hp])                  # (i, f, o) slab
        i_g = sig[:, 0 * Hp:1 * Hp]
        f_g = sig[:, 1 * Hp:2 * Hp]
        o_g = sig[:, 2 * Hp:3 * Hp]
        g_g = jnp.tanh(gates[:, 3 * Hp:])
        c_new = f_g * c + i_g * g_g
        h_new = o_g * jnp.tanh(c_new)
        if mask_tail:
            valid = (t_blk * time_block + tt) < seq_len
            h_new = jnp.where(valid, h_new, h)
            c_new = jnp.where(valid, c_new, c)
        return h_new, c_new

    h, c = lax.fori_loop(0, time_block, step, (h_ref[...], c_ref[...]),
                         unroll=unroll)
    h_ref[...] = h
    c_ref[...] = c

    @pl.when(t_blk == pl.num_programs(1) - 1)
    def _finalize():
        logits = (jnp.dot(h.astype(jnp.bfloat16), wfc_ref[...],
                          preferred_element_type=jnp.float32) + bfc_ref[...])
        out_ref[...] = _sigmoid(logits)


def lstm_model_forward(x, params, *, max_time_block=32):
    """x: (B, T, I) float32, batch-first like PyTorch. Returns (B, O)."""
    B, T, I = x.shape
    w_ih, w_hh, b_ih, b_hh, w_fc, b_fc = (
        params["w_ih"], params["w_hh"], params["b_ih"], params["b_hh"],
        params["w_fc"], params["b_fc"],
    )
    H = w_hh.shape[1]
    O = w_fc.shape[0]
    Hp = _round_up(H, 128)                 # 128-lane aligned gate blocks
    OP = _round_up(max(O, 1), 128)         # lane-dense FC output

    # --- weight prep (wrapper-side, free) ----------------------------------
    # PyTorch gate row order is (i, f, g, o); lay gates out as (i, f, o, g),
    # each in its own Hp-wide column block (padded lanes stay exactly zero).
    b_sum = (b_ih + b_hh).astype(jnp.float32)
    gate_slices = [slice(0 * H, 1 * H),    # i
                   slice(1 * H, 2 * H),    # f
                   slice(3 * H, 4 * H),    # o
                   slice(2 * H, 3 * H)]    # g
    w_ih_blk = jnp.zeros((I, 4 * Hp), jnp.float32)
    w_hh_blk = jnp.zeros((Hp, 4 * Hp), jnp.float32)
    bias_blk = jnp.zeros((4 * Hp,), jnp.float32)
    for k, sl in enumerate(gate_slices):
        w_ih_blk = w_ih_blk.at[:, k * Hp:k * Hp + H].set(w_ih[sl].T)
        w_hh_blk = w_hh_blk.at[:H, k * Hp:k * Hp + H].set(w_hh[sl].T)
        bias_blk = bias_blk.at[k * Hp:k * Hp + H].set(b_sum[sl])

    wfc_t = jnp.zeros((Hp, OP), jnp.float32).at[:H, :O].set(w_fc.T)
    bfc = jnp.zeros((1, OP), jnp.float32).at[:, :O].set(b_fc)

    whh_bf = w_hh_blk.astype(jnp.bfloat16)      # resident bf16 MXU operand
    wfc_bf = wfc_t.astype(jnp.bfloat16)

    # --- hoisted input projection + bias fold, emitted time-major ----------
    # One big MXU-friendly matmul (M = B*T) instead of M=BB inside the loop;
    # XLA fuses the (b,t)->(t,b) layout change into the matmul output.
    xg = jnp.einsum('bti,ig->tbg', x.astype(jnp.float32), w_ih_blk) + bias_blk

    # --- time blocking / padding -------------------------------------------
    Tb = max(1, _cdiv(T, max(1, max_time_block)))
    TT = _cdiv(T, Tb)
    T_pad = Tb * TT
    mask_tail = (T_pad != T)

    BP = _round_up(B, 8)
    xg = jnp.pad(xg, ((0, T_pad - T), (0, BP - B), (0, 0)))

    # Batch-parallel split only when 2 TensorCores exist (v7x); on v5e/v6e a
    # second batch block just serializes and doubles grid-step overhead.
    nb = 2 if (_num_tensorcores() >= 2 and BP >= 16 and BP % 16 == 0) else 1
    BB = BP // nb

    unroll = max(1, min(8, TT))
    kernel = functools.partial(lstm_kernel, hidden_pad=Hp, time_block=TT,
                               seq_len=T, mask_tail=mask_tail, unroll=unroll)

    resident = (whh_bf.size * 2 + wfc_bf.size * 2 + bfc.size * 4
                + 2 * TT * BB * 4 * Hp * 4     # double-buffered x-gate slab
                + 2 * BB * Hp * 4              # h / c scratch
                + BB * OP * 4)                 # resident output block
    cost = pl.CostEstimate(
        flops=int(2 * T_pad * BP * Hp * 4 * Hp + 2 * BP * Hp * OP),
        transcendentals=int(T_pad * BP * 5 * Hp + BP * OP),
        bytes_accessed=int(4 * xg.size + 2 * whh_bf.size + 2 * wfc_bf.size
                           + 4 * bfc.size + 4 * BP * OP),
    )

    out_p = pl.pallas_call(
        kernel,
        out_shape=jax.ShapeDtypeStruct((BP, OP), jnp.float32),
        grid_spec=pltpu.PrefetchScalarGridSpec(
            num_scalar_prefetch=0,
            grid=(nb, Tb),
            in_specs=[
                # (TT, BB, 4*Hp) slab of precomputed gate inputs per grid step.
                pl.BlockSpec((TT, BB, 4 * Hp), lambda b, t: (t, b, 0)),
                # Loop-invariant weights: single resident VMEM copy each.
                pl.BlockSpec(memory_space=pltpu.MemorySpace.VMEM),  # W_hh bf16
                pl.BlockSpec(memory_space=pltpu.MemorySpace.VMEM),  # W_fc bf16
                pl.BlockSpec(memory_space=pltpu.MemorySpace.VMEM),  # b_fc
            ],
            out_specs=pl.BlockSpec((BB, OP), lambda b, t: (b, 0)),
            scratch_shapes=[
                pltpu.VMEM((BB, Hp), jnp.float32),   # h state
                pltpu.VMEM((BB, Hp), jnp.float32),   # c state
            ],
        ),
        compiler_params=pltpu.CompilerParams(
            dimension_semantics=("parallel", "arbitrary"),
            vmem_limit_bytes=_vmem_limit_bytes(resident),
        ),
        cost_estimate=cost,
    )(xg, whh_bf, wfc_bf, bfc)

    return out_p[:B, :O]


def init_params(key, input_size, hidden_size, output_size):
    """Deterministic synthetic params matching nn.LSTM / nn.Linear shapes."""
    ks = jax.random.split(key, 6)
    k_lstm = 1.0 / jnp.sqrt(hidden_size)
    k_fc = 1.0 / jnp.sqrt(hidden_size)
    u = lambda k, shape, s: jax.random.uniform(k, shape, jnp.float32, -s, s)
    return {
        "w_ih": u(ks[0], (4 * hidden_size, input_size), k_lstm),
        "w_hh": u(ks[1], (4 * hidden_size, hidden_size), k_lstm),
        "b_ih": u(ks[2], (4 * hidden_size,), k_lstm),
        "b_hh": u(ks[3], (4 * hidden_size,), k_lstm),
        "w_fc": u(ks[4], (output_size, hidden_size), k_fc),
        "b_fc": u(ks[5], (output_size,), k_fc),
    }


def lstm_model_reference(x, params):
    """Pure-JAX f32 reference of the same forward pass (standard gate order)."""
    B, T, I = x.shape
    H = params["w_hh"].shape[1]
    wih_t = params["w_ih"].T
    whh_t = params["w_hh"].T
    bias = params["b_ih"] + params["b_hh"]

    def step(carry, x_t):
        h, c = carry
        gates = x_t @ wih_t + h @ whh_t + bias
        i = jax.nn.sigmoid(gates[:, 0 * H:1 * H])
        f = jax.nn.sigmoid(gates[:, 1 * H:2 * H])
        g = jnp.tanh(gates[:, 2 * H:3 * H])
        o = jax.nn.sigmoid(gates[:, 3 * H:4 * H])
        c = f * c + i * g
        h = o * jnp.tanh(c)
        return (h, c), None

    h0 = jnp.zeros((B, H), jnp.float32)
    c0 = jnp.zeros((B, H), jnp.float32)
    (h, _), _ = lax.scan(step, (h0, c0), jnp.transpose(x, (1, 0, 2)))
    return jax.nn.sigmoid(h @ params["w_fc"].T + params["b_fc"])


if __name__ == "__main__":
    batch, seq, input_size, hidden_size, output_size = 2, 8, 16, 32, 4

    key = jax.random.PRNGKey(0)
    k_x, k_p = jax.random.split(key)
    x = jax.random.normal(k_x, (batch, seq, input_size), jnp.float32)
    params = init_params(k_p, input_size, hidden_size, output_size)

    out = jax.block_until_ready(lstm_model_forward(x, params))
    ref = lstm_model_reference(x, params)

    assert out.shape == (batch, output_size)
    # bf16 MXU operands + approx EUP reciprocal in the kernel -> loosened tol
    # vs. the pure-f32 reference.
    assert jnp.allclose(out, ref, atol=2e-2, rtol=2e-2), (out, ref)

    print("KERNEL_OK")
</pallas_src>

<mosaic_0001>
module attributes {stable_mosaic.version = 11 : i64} {
  func.func @lstm_kernel(%arg0: i32, %arg1: i32, %arg2: memref<8x8x512xf32, #tpu.memory_space<vmem>>, %arg3: memref<128x512xbf16, #tpu.memory_space<vmem>>, %arg4: memref<128x128xbf16, #tpu.memory_space<vmem>>, %arg5: memref<1x128xf32, #tpu.memory_space<vmem>>, %arg6: memref<8x128xf32, #tpu.memory_space<vmem>>, %arg7: memref<8x128xf32, #tpu.memory_space<vmem>>, %arg8: memref<8x128xf32, #tpu.memory_space<vmem>>) attributes {dimension_semantics = [#tpu.dimension_semantics<parallel>, #tpu.dimension_semantics<arbitrary>], iteration_bounds = array<i64: 1, 1>, scalar_prefetch = 0 : i64, scratch_operands = 2 : i64, tpu.core_type = #tpu.core_type<tc>, window_params = [{transform_indices = @transform_0, window_bounds = array<i64: 8, 8, 512>}, {pipeline_mode = #tpu.pipeline_mode<synchronous>, transform_indices = @transform_1, window_bounds = array<i64: 128, 512>}, {pipeline_mode = #tpu.pipeline_mode<synchronous>, transform_indices = @transform_2, window_bounds = array<i64: 128, 128>}, {pipeline_mode = #tpu.pipeline_mode<synchronous>, transform_indices = @transform_3, window_bounds = array<i64: 1, 128>}, {transform_indices = @transform_4, window_bounds = array<i64: 8, 128>}]} {
    %c0_i32 = arith.constant 0 : i32
    %0 = arith.cmpi eq, %arg1, %c0_i32 : i32
    %1 = arith.extui %0 : i1 to i32
    %c0_i32_0 = arith.constant 0 : i32
    %2 = arith.cmpi ne, %1, %c0_i32_0 : i32
    scf.if %2 {
      %cst_52 = arith.constant 0.000000e+00 : f32
      %195 = vector.broadcast %cst_52 : f32 to vector<8x128xf32>
      %c0_53 = arith.constant 0 : index
      %c0_54 = arith.constant 0 : index
      %196 = vector.load %arg7[%c0_53, %c0_54] : memref<8x128xf32, #tpu.memory_space<vmem>>, vector<8x128xf32>
      tpu.vector_store %arg7[%c0_53, %c0_54], %195 {strides = array<i32>} : memref<8x128xf32, #tpu.memory_space<vmem>>, vector<8x128xf32>,
      %cst_55 = arith.constant 0.000000e+00 : f32
      %197 = vector.broadcast %cst_55 : f32 to vector<8x128xf32>
      %c0_56 = arith.constant 0 : index
      %c0_57 = arith.constant 0 : index
      %198 = vector.load %arg8[%c0_56, %c0_57] : memref<8x128xf32, #tpu.memory_space<vmem>>, vector<8x128xf32>
      tpu.vector_store %arg8[%c0_56, %c0_57], %197 {strides = array<i32>} : memref<8x128xf32, #tpu.memory_space<vmem>>, vector<8x128xf32>,
    } else {
    }
    %c0 = arith.constant 0 : index
    %c0_1 = arith.constant 0 : index
    %3 = vector.load %arg3[%c0, %c0_1] : memref<128x512xbf16, #tpu.memory_space<vmem>>, vector<128x512xbf16>
    %c0_2 = arith.constant 0 : index
    %c0_3 = arith.constant 0 : index
    %4 = vector.load %arg7[%c0_2, %c0_3] : memref<8x128xf32, #tpu.memory_space<vmem>>, vector<8x128xf32>
    %c0_4 = arith.constant 0 : index
    %c0_5 = arith.constant 0 : index
    %5 = vector.load %arg8[%c0_4, %c0_5] : memref<8x128xf32, #tpu.memory_space<vmem>>, vector<8x128xf32>
    %c0_i32_6 = arith.constant 0 : i32
    %6 = arith.index_cast %c0_i32_6 : i32 to index
    %c0_7 = arith.constant 0 : index
    %c0_8 = arith.constant 0 : index
    %7 = vector.load %arg2[%6, %c0_7, %c0_8] : memref<8x8x512xf32, #tpu.memory_space<vmem>>, vector<1x8x512xf32>
    %8 = vector.shape_cast %7 : vector<1x8x512xf32> to vector<8x512xf32>
    %9 = arith.truncf %4 : vector<8x128xf32> to vector<8x128xbf16>
    %cst = arith.constant dense<0.000000e+00> : vector<8x512xf32>
    %10 = tpu.matmul %9, %3, %cst {dimension_numbers = #tpu.dot_dimension_numbers<[1], [0], [0], [1], [0, 0, 1, 1], [], []>} : vector<8x128xbf16>, vector<128x512xbf16>, vector<8x512xf32> -> vector<8x512xf32>
    %11 = arith.addf %8, %10 : vector<8x512xf32>
    %12 = vector.extract_strided_slice %11 {offsets = [0, 0], sizes = [8, 384], strides = [1, 1]} : vector<8x512xf32> to vector<8x384xf32>
    %cst_9 = arith.constant 0.000000e+00 : f32
    %13 = vector.broadcast %cst_9 : f32 to vector<8x384xf32>
    %14 = arith.subf %13, %12 : vector<8x384xf32>
    %15 = math.exp %14 : vector<8x384xf32>
    %cst_10 = arith.constant 1.000000e+00 : f32
    %16 = vector.broadcast %cst_10 : f32 to vector<8x384xf32>
    %17 = arith.addf %16, %15 : vector<8x384xf32>
    %18 = tpu.reciprocal %17 {approx = true} : vector<8x384xf32> -> vector<8x384xf32>
    %19 = vector.extract_strided_slice %18 {offsets = [0, 0], sizes = [8, 128], strides = [1, 1]} : vector<8x384xf32> to vector<8x128xf32>
    %20 = vector.extract_strided_slice %18 {offsets = [0, 128], sizes = [8, 128], strides = [1, 1]} : vector<8x384xf32> to vector<8x128xf32>
    %21 = vector.extract_strided_slice %18 {offsets = [0, 256], sizes = [8, 128], strides = [1, 1]} : vector<8x384xf32> to vector<8x128xf32>
    %22 = vector.extract_strided_slice %11 {offsets = [0, 384], sizes = [8, 128], strides = [1, 1]} : vector<8x512xf32> to vector<8x128xf32>
    %23 = math.tanh %22 : vector<8x128xf32>
    %24 = arith.mulf %20, %5 : vector<8x128xf32>
    %25 = arith.mulf %19, %23 : vector<8x128xf32>
    %26 = arith.addf %24, %25 : vector<8x128xf32>
    %27 = math.tanh %26 : vector<8x128xf32>
    %28 = arith.mulf %21, %27 : vector<8x128xf32>
    %c1_i32 = arith.constant 1 : i32
    %29 = arith.index_cast %c1_i32 : i32 to index
    %c0_11 = arith.constant 0 : index
    %c0_12 = arith.constant 0 : index
    %30 = vector.load %arg2[%29, %c0_11, %c0_12] : memref<8x8x512xf32, #tpu.memory_space<vmem>>, vector<1x8x512xf32>
    %31 = vector.shape_cast %30 : vector<1x8x512xf32> to vector<8x512xf32>
    %32 = arith.truncf %28 : vector<8x128xf32> to vector<8x128xbf16>
    %cst_13 = arith.constant dense<0.000000e+00> : vector<8x512xf32>
    %33 = tpu.matmul %32, %3, %cst_13 {dimension_numbers = #tpu.dot_dimension_numbers<[1], [0], [0], [1], [0, 0, 1, 1], [], []>} : vector<8x128xbf16>, vector<128x512xbf16>, vector<8x512xf32> -> vector<8x512xf32>
    %34 = arith.addf %31, %33 : vector<8x512xf32>
    %35 = vector.extract_strided_slice %34 {offsets = [0, 0], sizes = [8, 384], strides = [1, 1]} : vector<8x512xf32> to vector<8x384xf32>
    %cst_14 = arith.constant 0.000000e+00 : f32
    %36 = vector.broadcast %cst_14 : f32 to vector<8x384xf32>
    %37 = arith.subf %36, %35 : vector<8x384xf32>
    %38 = math.exp %37 : vector<8x384xf32>
    %cst_15 = arith.constant 1.000000e+00 : f32
    %39 = vector.broadcast %cst_15 : f32 to vector<8x384xf32>
    %40 = arith.addf %39, %38 : vector<8x384xf32>
    %41 = tpu.reciprocal %40 {approx = true} : vector<8x384xf32> -> vector<8x384xf32>
    %42 = vector.extract_strided_slice %41 {offsets = [0, 0], sizes = [8, 128], strides = [1, 1]} : vector<8x384xf32> to vector<8x128xf32>
    %43 = vector.extract_strided_slice %41 {offsets = [0, 128], sizes = [8, 128], strides = [1, 1]} : vector<8x384xf32> to vector<8x128xf32>
    %44 = vector.extract_strided_slice %41 {offsets = [0, 256], sizes = [8, 128], strides = [1, 1]} : vector<8x384xf32> to vector<8x128xf32>
    %45 = vector.extract_strided_slice %34 {offsets = [0, 384], sizes = [8, 128], strides = [1, 1]} : vector<8x512xf32> to vector<8x128xf32>
    %46 = math.tanh %45 : vector<8x128xf32>
    %47 = arith.mulf %43, %26 : vector<8x128xf32>
    %48 = arith.mulf %42, %46 : vector<8x128xf32>
    %49 = arith.addf %47, %48 : vector<8x128xf32>
    %50 = math.tanh %49 : vector<8x128xf32>
    %51 = arith.mulf %44, %50 : vector<8x128xf32>
    %c2_i32 = arith.constant 2 : i32
    %52 = arith.index_cast %c2_i32 : i32 to index
    %c0_16 = arith.constant 0 : index
    %c0_17 = arith.constant 0 : index
    %53 = vector.load %arg2[%52, %c0_16, %c0_17] : memref<8x8x512xf32, #tpu.memory_space<vmem>>, vector<1x8x512xf32>
    %54 = vector.shape_cast %53 : vector<1x8x512xf32> to vector<8x512xf32>
    %55 = arith.truncf %51 : vector<8x128xf32> to vector<8x128xbf16>
    %cst_18 = arith.constant dense<0.000000e+00> : vector<8x512xf32>
    %56 = tpu.matmul %55, %3, %cst_18 {dimension_numbers = #tpu.dot_dimension_numbers<[1], [0], [0], [1], [0, 0, 1, 1], [], []>} : vector<8x128xbf16>, vector<128x512xbf16>, vector<8x512xf32> -> vector<8x512xf32>
    %57 = arith.addf %54, %56 : vector<8x512xf32>
    %58 = vector.extract_strided_slice %57 {offsets = [0, 0], sizes = [8, 384], strides = [1, 1]} : vector<8x512xf32> to vector<8x384xf32>
    %cst_19 = arith.constant 0.000000e+00 : f32
    %59 = vector.broadcast %cst_19 : f32 to vector<8x384xf32>
    %60 = arith.subf %59, %58 : vector<8x384xf32>
    %61 = math.exp %60 : vector<8x384xf32>
    %cst_20 = arith.constant 1.000000e+00 : f32
    %62 = vector.broadcast %cst_20 : f32 to vector<8x384xf32>
    %63 = arith.addf %62, %61 : vector<8x384xf32>
    %64 = tpu.reciprocal %63 {approx = true} : vector<8x384xf32> -> vector<8x384xf32>
    %65 = vector.extract_strided_slice %64 {offsets = [0, 0], sizes = [8, 128], strides = [1, 1]} : vector<8x384xf32> to vector<8x128xf32>
    %66 = vector.extract_strided_slice %64 {offsets = [0, 128], sizes = [8, 128], strides = [1, 1]} : vector<8x384xf32> to vector<8x128xf32>
    %67 = vector.extract_strided_slice %64 {offsets = [0, 256], sizes = [8, 128], strides = [1, 1]} : vector<8x384xf32> to vector<8x128xf32>
    %68 = vector.extract_strided_slice %57 {offsets = [0, 384], sizes = [8, 128], strides = [1, 1]} : vector<8x512xf32> to vector<8x128xf32>
    %69 = math.tanh %68 : vector<8x128xf32>
    %70 = arith.mulf %66, %49 : vector<8x128xf32>
    %71 = arith.mulf %65, %69 : vector<8x128xf32>
    %72 = arith.addf %70, %71 : vector<8x128xf32>
    %73 = math.tanh %72 : vector<8x128xf32>
    %74 = arith.mulf %67, %73 : vector<8x128xf32>
    %c3_i32 = arith.constant 3 : i32
    %75 = arith.index_cast %c3_i32 : i32 to index
    %c0_21 = arith.constant 0 : index
    %c0_22 = arith.constant 0 : index
    %76 = vector.load %arg2[%75, %c0_21, %c0_22] : memref<8x8x512xf32, #tpu.memory_space<vmem>>, vector<1x8x512xf32>
    %77 = vector.shape_cast %76 : vector<1x8x512xf32> to vector<8x512xf32>
    %78 = arith.truncf %74 : vector<8x128xf32> to vector<8x128xbf16>
    %cst_23 = arith.constant dense<0.000000e+00> : vector<8x512xf32>
    %79 = tpu.matmul %78, %3, %cst_23 {dimension_numbers = #tpu.dot_dimension_numbers<[1], [0], [0], [1], [0, 0, 1, 1], [], []>} : vector<8x128xbf16>, vector<128x512xbf16>, vector<8x512xf32> -> vector<8x512xf32>
    %80 = arith.addf %77, %79 : vector<8x512xf32>
    %81 = vector.extract_strided_slice %80 {offsets = [0, 0], sizes = [8, 384], strides = [1, 1]} : vector<8x512xf32> to vector<8x384xf32>
    %cst_24 = arith.constant 0.000000e+00 : f32
    %82 = vector.broadcast %cst_24 : f32 to vector<8x384xf32>
    %83 = arith.subf %82, %81 : vector<8x384xf32>
    %84 = math.exp %83 : vector<8x384xf32>
    %cst_25 = arith.constant 1.000000e+00 : f32
    %85 = vector.broadcast %cst_25 : f32 to vector<8x384xf32>
    %86 = arith.addf %85, %84 : vector<8x384xf32>
    %87 = tpu.reciprocal %86 {approx = true} : vector<8x384xf32> -> vector<8x384xf32>
    %88 = vector.extract_strided_slice %87 {offsets = [0, 0], sizes = [8, 128], strides = [1, 1]} : vector<8x384xf32> to vector<8x128xf32>
    %89 = vector.extract_strided_slice %87 {offsets = [0, 128], sizes = [8, 128], strides = [1, 1]} : vector<8x384xf32> to vector<8x128xf32>
    %90 = vector.extract_strided_slice %87 {offsets = [0, 256], sizes = [8, 128], strides = [1, 1]} : vector<8x384xf32> to vector<8x128xf32>
    %91 = vector.extract_strided_slice %80 {offsets = [0, 384], sizes = [8, 128], strides = [1, 1]} : vector<8x512xf32> to vector<8x128xf32>
    %92 = math.tanh %91 : vector<8x128xf32>
    %93 = arith.mulf %89, %72 : vector<8x128xf32>
    %94 = arith.mulf %88, %92 : vector<8x128xf32>
    %95 = arith.addf %93, %94 : vector<8x128xf32>
    %96 = math.tanh %95 : vector<8x128xf32>
    %97 = arith.mulf %90, %96 : vector<8x128xf32>
    %c4_i32 = arith.constant 4 : i32
    %98 = arith.index_cast %c4_i32 : i32 to index
    %c0_26 = arith.constant 0 : index
    %c0_27 = arith.constant 0 : index
    %99 = vector.load %arg2[%98, %c0_26, %c0_27] : memref<8x8x512xf32, #tpu.memory_space<vmem>>, vector<1x8x512xf32>
    %100 = vector.shape_cast %99 : vector<1x8x512xf32> to vector<8x512xf32>
    %101 = arith.truncf %97 : vector<8x128xf32> to vector<8x128xbf16>
    %cst_28 = arith.constant dense<0.000000e+00> : vector<8x512xf32>
    %102 = tpu.matmul %101, %3, %cst_28 {dimension_numbers = #tpu.dot_dimension_numbers<[1], [0], [0], [1], [0, 0, 1, 1], [], []>} : vector<8x128xbf16>, vector<128x512xbf16>, vector<8x512xf32> -> vector<8x512xf32>
    %103 = arith.addf %100, %102 : vector<8x512xf32>
    %104 = vector.extract_strided_slice %103 {offsets = [0, 0], sizes = [8, 384], strides = [1, 1]} : vector<8x512xf32> to vector<8x384xf32>
    %cst_29 = arith.constant 0.000000e+00 : f32
    %105 = vector.broadcast %cst_29 : f32 to vector<8x384xf32>
    %106 = arith.subf %105, %104 : vector<8x384xf32>
    %107 = math.exp %106 : vector<8x384xf32>
    %cst_30 = arith.constant 1.000000e+00 : f32
    %108 = vector.broadcast %cst_30 : f32 to vector<8x384xf32>
    %109 = arith.addf %108, %107 : vector<8x384xf32>
    %110 = tpu.reciprocal %109 {approx = true} : vector<8x384xf32> -> vector<8x384xf32>
    %111 = vector.extract_strided_slice %110 {offsets = [0, 0], sizes = [8, 128], strides = [1, 1]} : vector<8x384xf32> to vector<8x128xf32>
    %112 = vector.extract_strided_slice %110 {offsets = [0, 128], sizes = [8, 128], strides = [1, 1]} : vector<8x384xf32> to vector<8x128xf32>
    %113 = vector.extract_strided_slice %110 {offsets = [0, 256], sizes = [8, 128], strides = [1, 1]} : vector<8x384xf32> to vector<8x128xf32>
    %114 = vector.extract_strided_slice %103 {offsets = [0, 384], sizes = [8, 128], strides = [1, 1]} : vector<8x512xf32> to vector<8x128xf32>
    %115 = math.tanh %114 : vector<8x128xf32>
    %116 = arith.mulf %112, %95 : vector<8x128xf32>
    %117 = arith.mulf %111, %115 : vector<8x128xf32>
    %118 = arith.addf %116, %117 : vector<8x128xf32>
    %119 = math.tanh %118 : vector<8x128xf32>
    %120 = arith.mulf %113, %119 : vector<8x128xf32>
    %c5_i32 = arith.constant 5 : i32
    %121 = arith.index_cast %c5_i32 : i32 to index
    %c0_31 = arith.constant 0 : index
    %c0_32 = arith.constant 0 : index
    %122 = vector.load %arg2[%121, %c0_31, %c0_32] : memref<8x8x512xf32, #tpu.memory_space<vmem>>, vector<1x8x512xf32>
    %123 = vector.shape_cast %122 : vector<1x8x512xf32> to vector<8x512xf32>
    %124 = arith.truncf %120 : vector<8x128xf32> to vector<8x128xbf16>
    %cst_33 = arith.constant dense<0.000000e+00> : vector<8x512xf32>
    %125 = tpu.matmul %124, %3, %cst_33 {dimension_numbers = #tpu.dot_dimension_numbers<[1], [0], [0], [1], [0, 0, 1, 1], [], []>} : vector<8x128xbf16>, vector<128x512xbf16>, vector<8x512xf32> -> vector<8x512xf32>
    %126 = arith.addf %123, %125 : vector<8x512xf32>
    %127 = vector.extract_strided_slice %126 {offsets = [0, 0], sizes = [8, 384], strides = [1, 1]} : vector<8x512xf32> to vector<8x384xf32>
    %cst_34 = arith.constant 0.000000e+00 : f32
    %128 = vector.broadcast %cst_34 : f32 to vector<8x384xf32>
    %129 = arith.subf %128, %127 : vector<8x384xf32>
    %130 = math.exp %129 : vector<8x384xf32>
    %cst_35 = arith.constant 1.000000e+00 : f32
    %131 = vector.broadcast %cst_35 : f32 to vector<8x384xf32>
    %132 = arith.addf %131, %130 : vector<8x384xf32>
    %133 = tpu.reciprocal %132 {approx = true} : vector<8x384xf32> -> vector<8x384xf32>
    %134 = vector.extract_strided_slice %133 {offsets = [0, 0], sizes = [8, 128], strides = [1, 1]} : vector<8x384xf32> to vector<8x128xf32>
    %135 = vector.extract_strided_slice %133 {offsets = [0, 128], sizes = [8, 128], strides = [1, 1]} : vector<8x384xf32> to vector<8x128xf32>
    %136 = vector.extract_strided_slice %133 {offsets = [0, 256], sizes = [8, 128], strides = [1, 1]} : vector<8x384xf32> to vector<8x128xf32>
    %137 = vector.extract_strided_slice %126 {offsets = [0, 384], sizes = [8, 128], strides = [1, 1]} : vector<8x512xf32> to vector<8x128xf32>
    %138 = math.tanh %137 : vector<8x128xf32>
    %139 = arith.mulf %135, %118 : vector<8x128xf32>
    %140 = arith.mulf %134, %138 : vector<8x128xf32>
    %141 = arith.addf %139, %140 : vector<8x128xf32>
    %142 = math.tanh %141 : vector<8x128xf32>
    %143 = arith.mulf %136, %142 : vector<8x128xf32>
    %c6_i32 = arith.constant 6 : i32
    %144 = arith.index_cast %c6_i32 : i32 to index
    %c0_36 = arith.constant 0 : index
    %c0_37 = arith.constant 0 : index
    %145 = vector.load %arg2[%144, %c0_36, %c0_37] : memref<8x8x512xf32, #tpu.memory_space<vmem>>, vector<1x8x512xf32>
    %146 = vector.shape_cast %145 : vector<1x8x512xf32> to vector<8x512xf32>
    %147 = arith.truncf %143 : vector<8x128xf32> to vector<8x128xbf16>
    %cst_38 = arith.constant dense<0.000000e+00> : vector<8x512xf32>
    %148 = tpu.matmul %147, %3, %cst_38 {dimension_numbers = #tpu.dot_dimension_numbers<[1], [0], [0], [1], [0, 0, 1, 1], [], []>} : vector<8x128xbf16>, vector<128x512xbf16>, vector<8x512xf32> -> vector<8x512xf32>
    %149 = arith.addf %146, %148 : vector<8x512xf32>
    %150 = vector.extract_strided_slice %149 {offsets = [0, 0], sizes = [8, 384], strides = [1, 1]} : vector<8x512xf32> to vector<8x384xf32>
    %cst_39 = arith.constant 0.000000e+00 : f32
    %151 = vector.broadcast %cst_39 : f32 to vector<8x384xf32>
    %152 = arith.subf %151, %150 : vector<8x384xf32>
    %153 = math.exp %152 : vector<8x384xf32>
    %cst_40 = arith.constant 1.000000e+00 : f32
    %154 = vector.broadcast %cst_40 : f32 to vector<8x384xf32>
    %155 = arith.addf %154, %153 : vector<8x384xf32>
    %156 = tpu.reciprocal %155 {approx = true} : vector<8x384xf32> -> vector<8x384xf32>
    %157 = vector.extract_strided_slice %156 {offsets = [0, 0], sizes = [8, 128], strides = [1, 1]} : vector<8x384xf32> to vector<8x128xf32>
    %158 = vector.extract_strided_slice %156 {offsets = [0, 128], sizes = [8, 128], strides = [1, 1]} : vector<8x384xf32> to vector<8x128xf32>
    %159 = vector.extract_strided_slice %156 {offsets = [0, 256], sizes = [8, 128], strides = [1, 1]} : vector<8x384xf32> to vector<8x128xf32>
    %160 = vector.extract_strided_slice %149 {offsets = [0, 384], sizes = [8, 128], strides = [1, 1]} : vector<8x512xf32> to vector<8x128xf32>
    %161 = math.tanh %160 : vector<8x128xf32>
    %162 = arith.mulf %158, %141 : vector<8x128xf32>
    %163 = arith.mulf %157, %161 : vector<8x128xf32>
    %164 = arith.addf %162, %163 : vector<8x128xf32>
    %165 = math.tanh %164 : vector<8x128xf32>
    %166 = arith.mulf %159, %165 : vector<8x128xf32>
    %c7_i32 = arith.constant 7 : i32
    %167 = arith.index_cast %c7_i32 : i32 to index
    %c0_41 = arith.constant 0 : index
    %c0_42 = arith.constant 0 : index
    %168 = vector.load %arg2[%167, %c0_41, %c0_42] : memref<8x8x512xf32, #tpu.memory_space<vmem>>, vector<1x8x512xf32>
    %169 = vector.shape_cast %168 : vector<1x8x512xf32> to vector<8x512xf32>
    %170 = arith.truncf %166 : vector<8x128xf32> to vector<8x128xbf16>
    %cst_43 = arith.constant dense<0.000000e+00> : vector<8x512xf32>
    %171 = tpu.matmul %170, %3, %cst_43 {dimension_numbers = #tpu.dot_dimension_numbers<[1], [0], [0], [1], [0, 0, 1, 1], [], []>} : vector<8x128xbf16>, vector<128x512xbf16>, vector<8x512xf32> -> vector<8x512xf32>
    %172 = arith.addf %169, %171 : vector<8x512xf32>
    %173 = vector.extract_strided_slice %172 {offsets = [0, 0], sizes = [8, 384], strides = [1, 1]} : vector<8x512xf32> to vector<8x384xf32>
    %cst_44 = arith.constant 0.000000e+00 : f32
    %174 = vector.broadcast %cst_44 : f32 to vector<8x384xf32>
    %175 = arith.subf %174, %173 : vector<8x384xf32>
    %176 = math.exp %175 : vector<8x384xf32>
    %cst_45 = arith.constant 1.000000e+00 : f32
    %177 = vector.broadcast %cst_45 : f32 to vector<8x384xf32>
    %178 = arith.addf %177, %176 : vector<8x384xf32>
    %179 = tpu.reciprocal %178 {approx = true} : vector<8x384xf32> -> vector<8x384xf32>
    %180 = vector.extract_strided_slice %179 {offsets = [0, 0], sizes = [8, 128], strides = [1, 1]} : vector<8x384xf32> to vector<8x128xf32>
    %181 = vector.extract_strided_slice %179 {offsets = [0, 128], sizes = [8, 128], strides = [1, 1]} : vector<8x384xf32> to vector<8x128xf32>
    %182 = vector.extract_strided_slice %179 {offsets = [0, 256], sizes = [8, 128], strides = [1, 1]} : vector<8x384xf32> to vector<8x128xf32>
    %183 = vector.extract_strided_slice %172 {offsets = [0, 384], sizes = [8, 128], strides = [1, 1]} : vector<8x512xf32> to vector<8x128xf32>
    %184 = math.tanh %183 : vector<8x128xf32>
    %185 = arith.mulf %181, %164 : vector<8x128xf32>
    %186 = arith.mulf %180, %184 : vector<8x128xf32>
    %187 = arith.addf %185, %186 : vector<8x128xf32>
    %188 = math.tanh %187 : vector<8x128xf32>
    %189 = arith.mulf %182, %188 : vector<8x128xf32>
    %c8_i32 = arith.constant 8 : i32
    %c0_46 = arith.constant 0 : index
    %c0_47 = arith.constant 0 : index
    %190 = vector.load %arg7[%c0_46, %c0_47] : memref<8x128xf32, #tpu.memory_space<vmem>>, vector<8x128xf32>
    tpu.vector_store %arg7[%c0_46, %c0_47], %189 {strides = array<i32>} : memref<8x128xf32, #tpu.memory_space<vmem>>, vector<8x128xf32>,
    %c0_48 = arith.constant 0 : index
    %c0_49 = arith.constant 0 : index
    %191 = vector.load %arg8[%c0_48, %c0_49] : memref<8x128xf32, #tpu.memory_space<vmem>>, vector<8x128xf32>
    tpu.vector_store %arg8[%c0_48, %c0_49], %187 {strides = array<i32>} : memref<8x128xf32, #tpu.memory_space<vmem>>, vector<8x128xf32>,
    %c0_i32_50 = arith.constant 0 : i32
    %192 = arith.cmpi eq, %arg1, %c0_i32_50 : i32
    %193 = arith.extui %192 : i1 to i32
    %c0_i32_51 = arith.constant 0 : i32
    %194 = arith.cmpi ne, %193, %c0_i32_51 : i32
    scf.if %194 {
      %195 = arith.truncf %189 : vector<8x128xf32> to vector<8x128xbf16>
      %c0_52 = arith.constant 0 : index
      %c0_53 = arith.constant 0 : index
      %196 = vector.load %arg4[%c0_52, %c0_53] : memref<128x128xbf16, #tpu.memory_space<vmem>>, vector<128x128xbf16>
      %cst_54 = arith.constant dense<0.000000e+00> : vector<8x128xf32>
      %197 = tpu.matmul %195, %196, %cst_54 {dimension_numbers = #tpu.dot_dimension_numbers<[1], [0], [0], [1], [0, 0, 1, 1], [], []>} : vector<8x128xbf16>, vector<128x128xbf16>, vector<8x128xf32> -> vector<8x128xf32>
      %c0_55 = arith.constant 0 : index
      %c0_56 = arith.constant 0 : index
      %198 = vector.load %arg5[%c0_55, %c0_56] : memref<1x128xf32, #tpu.memory_space<vmem>>, vector<1x128xf32>
      %199 = vector.broadcast %198 : vector<1x128xf32> to vector<8x128xf32>
      %200 = arith.addf %197, %199 : vector<8x128xf32>
      %cst_57 = arith.constant 0.000000e+00 : f32
      %201 = vector.broadcast %cst_57 : f32 to vector<8x128xf32>
      %202 = arith.subf %201, %200 : vector<8x128xf32>
      %203 = math.exp %202 : vector<8x128xf32>
      %cst_58 = arith.constant 1.000000e+00 : f32
      %204 = vector.broadcast %cst_58 : f32 to vector<8x128xf32>
      %205 = arith.addf %204, %203 : vector<8x128xf32>
      %206 = tpu.reciprocal %205 {approx = true} : vector<8x128xf32> -> vector<8x128xf32>
      %c0_59 = arith.constant 0 : index
      %c0_60 = arith.constant 0 : index
      %207 = vector.load %arg6[%c0_59, %c0_60] : memref<8x128xf32, #tpu.memory_space<vmem>>, vector<8x128xf32>
      tpu.vector_store %arg6[%c0_59, %c0_60], %206 {strides = array<i32>} : memref<8x128xf32, #tpu.memory_space<vmem>>, vector<8x128xf32>,
    } else {
    }
    return
  }
  func.func @transform_0(%arg0: i32, %arg1: i32) -> (i32, i32, i32) {
    %c0_i32 = arith.constant 0 : i32
    %c0_i32_0 = arith.constant 0 : i32
    return %arg1, %arg0, %c0_i32 : i32, i32, i32
  }
  func.func @transform_1(%arg0: i32, %arg1: i32) -> (i32, i32) {
    %c0_i32 = arith.constant 0 : i32
    %c0_i32_0 = arith.constant 0 : i32
    %c0_i32_1 = arith.constant 0 : i32
    return %c0_i32, %c0_i32_0 : i32, i32
  }
  func.func @transform_2(%arg0: i32, %arg1: i32) -> (i32, i32) {
    %c0_i32 = arith.constant 0 : i32
    %c0_i32_0 = arith.constant 0 : i32
    %c0_i32_1 = arith.constant 0 : i32
    return %c0_i32, %c0_i32_0 : i32, i32
  }
  func.func @transform_3(%arg0: i32, %arg1: i32) -> (i32, i32) {
    %c0_i32 = arith.constant 0 : i32
    %c0_i32_0 = arith.constant 0 : i32
    %c0_i32_1 = arith.constant 0 : i32
    return %c0_i32, %c0_i32_0 : i32, i32
  }
  func.func @transform_4(%arg0: i32, %arg1: i32) -> (i32, i32) {
    %c0_i32 = arith.constant 0 : i32
    %c0_i32_0 = arith.constant 0 : i32
    return %arg0, %c0_i32 : i32, i32
  }
}

</mosaic_0001>

<llo_original>
// kernel: tpu_custom_call.1
$region0: #{tpu_custom_call.1}
  #allocation0 [shape = 'u32[]', space=smem, size = 0x4, offset = 0x4, fixed_abs, tag = 'smem constant byte address 0x4 - core index']
  #allocation1 [shape = 'u32[144,128]{1,0:T(1,128)}', space=vmem, size = 0x12000, scoped, tag = 'internal scratch']
  #allocation2 [shape = 'f32[8,128]{1,0:T(8,128)}', space=vmem, size = 0x1000, scoped, tag = 'scratch operand']
  #allocation3 [shape = 'f32[8,128]{1,0:T(8,128)}', space=vmem, size = 0x1000, scoped, tag = 'scratch operand']
  %s0 = inlined_call_operand.hbm [shape: f32[8,8,512], index: 0, kind: input, shape index: {}]
  %s1 = inlined_call_operand.hbm [shape: bf16[128,512], index: 1, kind: input, shape index: {}]
  %s2 = inlined_call_operand.hbm [shape: bf16[128,128], index: 2, kind: input, shape index: {}]
  %s3 = inlined_call_operand.vmem [shape: f32[1,128], index: 3, kind: input, shape index: {}]
  %s4 = inlined_call_operand.hbm [shape: f32[8,128], index: 4, kind: output, shape index: {}]
  %s5 = sld [smem:[#allocation0]]
  $region46: #{tpu_custom_call.1} parent=0
    _
  %s7 = ssub.s32 1, %s5
  %s8 = scalar_select 0, %s7, %s5
  $region1: #{tpu_custom_call.1} parent=0
    #allocation4 [shape = 'u8[131072]{0}', space=vmem, size = 0x20000, scoped, tag = 'input window, operand 0, single buffered']
    #allocation5 [shape = 's32[1]{0}', space=sflag, size = 0x4, scoped, tag = 'scoped memory for tpu_custom_call.1']
    #allocation6 [shape = 's32[1]{0}', space=sflag, size = 0x4, scoped, tag = 'scoped memory for tpu_custom_call.1']
    #allocation7 [shape = 'u8[131072]{0}', space=vmem, size = 0x20000, scoped, tag = 'input window, operand 1, single buffered']
    #allocation8 [shape = 's32[1]{0}', space=sflag, size = 0x4, scoped, tag = 'scoped memory for tpu_custom_call.1']
    #allocation9 [shape = 'u8[32768]{0}', space=vmem, size = 0x8000, scoped, tag = 'input window, operand 2, single buffered']
    #allocation10 [shape = 'u8[4096]{0}', space=vmem, size = 0x1000, scoped, tag = 'output window, operand 0, single buffered']
    %9 = vsyncpa [#allocation5], 0
    %10 = vsyncpa [#allocation8], 0
    %11 = vsyncpa [#allocation6], 0
    // Predicated region
    $region2: #{tpu_custom_call.1} parent=1 // pred_check
      _
    $region3: #{tpu_custom_call.1} parent=1 // pred_check_branch
      %13 = sbr.rel (0) target = $region5
    $region4: #{tpu_custom_call.1} parent=1 // pred_region
      %s15 = ssub.s32 4096, 4096
      %16 = vsyncadd [#allocation5], %s15
      %s17 = sshll.u32 [#allocation4], 4
      %s18 = int_to_ptr.vmem [resolvable:$true] %s17
      %23 = dma.hbm_to_vmem [thread:$0]  %s0, 4096, %s18, [#allocation5], 512, 512, 32
    $region5: #{tpu_custom_call.1} parent=1 // pred_fallthru
      _
    // Predicated region
    $region6: #{tpu_custom_call.1} parent=1 // pred_check
      _
    $region7: #{tpu_custom_call.1} parent=1 // pred_check_branch
      %25 = sbr.rel (0) target = $region9
    $region8: #{tpu_custom_call.1} parent=1 // pred_region
      %s27 = ssub.s32 4096, 4096
      %28 = vsyncadd [#allocation8], %s27
      %s29 = sshll.u32 [#allocation7], 4
      %s30 = int_to_ptr.vmem [resolvable:$true] %s29
      %35 = dma.hbm_to_vmem [thread:$0]  %s1, 4096, %s30, [#allocation8], 256, 256, 16
    $region9: #{tpu_custom_call.1} parent=1 // pred_fallthru
      _
    // Predicated region
    $region10: #{tpu_custom_call.1} parent=1 // pred_check
      _
    $region11: #{tpu_custom_call.1} parent=1 // pred_check_branch
      %37 = sbr.rel (0) target = $region13
    $region12: #{tpu_custom_call.1} parent=1 // pred_region
      %s39 = ssub.s32 1024, 1024
      %40 = vsyncadd [#allocation8], %s39
      %s41 = sshll.u32 [#allocation9], 4
      %s42 = int_to_ptr.vmem [resolvable:$true] %s41
      %47 = dma.hbm_to_vmem [thread:$0]  %s2, 1024, %s42, [#allocation8], 64, 64, 4
    $region13: #{tpu_custom_call.1} parent=1 // pred_fallthru
      _
    // Predicated region
    $region14: #{tpu_custom_call.1} parent=1 // pred_check
      _
    $region15: #{tpu_custom_call.1} parent=1 // pred_check_branch
      %49 = sbr.rel (0) target = $region17
    $region16: #{tpu_custom_call.1} parent=1 // pred_region
      _
    $region17: #{tpu_custom_call.1} parent=1 // pred_fallthru
      _
    // Predicated region
    $region18: #{tpu_custom_call.1} parent=1 // pred_check
      _
    $region19: #{tpu_custom_call.1} parent=1 // pred_check_branch
      %51 = sbr.rel (0) target = $region21
    $region20: #{tpu_custom_call.1} parent=1 // pred_region
      %52 = dma.done [#allocation5], 4096
    $region21: #{tpu_custom_call.1} parent=1 // pred_fallthru
      _
    // Predicated region
    $region22: #{tpu_custom_call.1} parent=1 // pred_check
      _
    $region23: #{tpu_custom_call.1} parent=1 // pred_check_branch
      %54 = sbr.rel (0) target = $region25
    $region24: #{tpu_custom_call.1} parent=1 // pred_region
      %55 = dma.done [#allocation8], 4096
    $region25: #{tpu_custom_call.1} parent=1 // pred_fallthru
      _
    // Predicated region
    $region26: #{tpu_custom_call.1} parent=1 // pred_check
      _
    $region27: #{tpu_custom_call.1} parent=1 // pred_check_branch
      %57 = sbr.rel (0) target = $region29
    $region28: #{tpu_custom_call.1} parent=1 // pred_region
      %58 = dma.done [#allocation8], 1024
    $region29: #{tpu_custom_call.1} parent=1 // pred_fallthru
      _
    %p60 = scmp.eq.s32.totalorder 0, 0
    // Predicated region
    $region30: #{tpu_custom_call.1} parent=1 // pred_check
      %p61 = pneg %p60
    $region31: #{tpu_custom_call.1} parent=1 // pred_check_branch
      %63 = sbr.rel (%p61) target = $region33
    $region32: #{tpu_custom_call.1} parent=1 // pred_region
      %64 = vst [vmem:[#allocation2] sm:$0xff] 0.0
      %65 = vst [vmem:[#allocation3] sm:$0xff] 0.0
    $region33: #{tpu_custom_call.1} parent=1 // pred_fallthru
      _
    %v66 = vld [vmem:[#allocation7] sm:$0xff]
    %v67 = vld [vmem:[#allocation7 + $0x8] sm:$0xff]
    %v68 = vld [vmem:[#allocation7 + $0x10] sm:$0xff]
    %v69 = vld [vmem:[#allocation7 + $0x18] sm:$0xff]
    %v70 = vld [vmem:[#allocation7 + $0x20] sm:$0xff]
    %v71 = vld [vmem:[#allocation7 + $0x28] sm:$0xff]
    %v72 = vld [vmem:[#allocation7 + $0x30] sm:$0xff]
    %v73 = vld [vmem:[#allocation7 + $0x38] sm:$0xff]
    %v74 = vld [vmem:[#allocation7 + $0x40] sm:$0xff]
    %v75 = vld [vmem:[#allocation7 + $0x48] sm:$0xff]
    %v76 = vld [vmem:[#allocation7 + $0x50] sm:$0xff]
    %v77 = vld [vmem:[#allocation7 + $0x58] sm:$0xff]
    %v78 = vld [vmem:[#allocation7 + $0x60] sm:$0xff]
    %v79 = vld [vmem:[#allocation7 + $0x68] sm:$0xff]
    %v80 = vld [vmem:[#allocation7 + $0x70] sm:$0xff]
    %v81 = vld [vmem:[#allocation7 + $0x78] sm:$0xff]
    %v82 = vld [vmem:[#allocation7 + $0x80] sm:$0xff]
    %v83 = vld [vmem:[#allocation7 + $0x88] sm:$0xff]
    %v84 = vld [vmem:[#allocation7 + $0x90] sm:$0xff]
    %v85 = vld [vmem:[#allocation7 + $0x98] sm:$0xff]
    %v86 = vld [vmem:[#allocation7 + $0xa0] sm:$0xff]
    %v87 = vld [vmem:[#allocation7 + $0xa8] sm:$0xff]
    %v88 = vld [vmem:[#allocation7 + $0xb0] sm:$0xff]
    %v89 = vld [vmem:[#allocation7 + $0xb8] sm:$0xff]
    %v90 = vld [vmem:[#allocation7 + $0xc0] sm:$0xff]
    %v91 = vld [vmem:[#allocation7 + $0xc8] sm:$0xff]
    %v92 = vld [vmem:[#allocation7 + $0xd0] sm:$0xff]
    %v93 = vld [vmem:[#allocation7 + $0xd8] sm:$0xff]
    %v94 = vld [vmem:[#allocation7 + $0xe0] sm:$0xff]
    %v95 = vld [vmem:[#allocation7 + $0xe8] sm:$0xff]
    %v96 = vld [vmem:[#allocation7 + $0xf0] sm:$0xff]
    %v97 = vld [vmem:[#allocation7 + $0xf8] sm:$0xff]
    %v98 = vld [vmem:[#allocation2] sm:$0xff]
    %v99 = vld [vmem:[#allocation3] sm:$0xff]
    %v100 = vld [vmem:[#allocation4] sm:$0xff]
    %v101 = vld [vmem:[#allocation4 + $0x8] sm:$0xff]
    %v102 = vld [vmem:[#allocation4 + $0x10] sm:$0xff]
    %v103 = vld [vmem:[#allocation4 + $0x18] sm:$0xff]
    %v104 = vpack.c.bf16 %v98, %v98
    %v137 = vunpack.c.l.b16 %v66
    %v138 = vunpack.c.h.b16 %v66
    %v139 = vunpack.c.l.b16 %v67
    %v140 = vunpack.c.h.b16 %v67
    %v141 = vunpack.c.l.b16 %v68
    %v142 = vunpack.c.h.b16 %v68
    %v143 = vunpack.c.l.b16 %v69
    %v144 = vunpack.c.h.b16 %v69
    %v145 = vunpack.c.l.b16 %v70
    %v146 = vunpack.c.h.b16 %v70
    %v147 = vunpack.c.l.b16 %v71
    %v148 = vunpack.c.h.b16 %v71
    %v149 = vunpack.c.l.b16 %v72
    %v150 = vunpack.c.h.b16 %v72
    %v151 = vunpack.c.l.b16 %v73
    %v152 = vunpack.c.h.b16 %v73
    %v153 = vunpack.c.l.b16 %v74
    %v154 = vunpack.c.h.b16 %v74
    %v155 = vunpack.c.l.b16 %v75
    %v156 = vunpack.c.h.b16 %v75
    %v157 = vunpack.c.l.b16 %v76
    %v158 = vunpack.c.h.b16 %v76
    %v159 = vunpack.c.l.b16 %v77
    %v160 = vunpack.c.h.b16 %v77
    %v161 = vunpack.c.l.b16 %v78
    %v162 = vunpack.c.h.b16 %v78
    %v163 = vunpack.c.l.b16 %v79
    %v164 = vunpack.c.h.b16 %v79
    %v165 = vunpack.c.l.b16 %v80
    %v166 = vunpack.c.h.b16 %v80
    %v167 = vunpack.c.l.b16 %v81
    %v168 = vunpack.c.h.b16 %v81
    %v169 = vunpack.c.l.b16 %v82
    %v170 = vunpack.c.h.b16 %v82
    %v171 = vunpack.c.l.b16 %v83
    %v172 = vunpack.c.h.b16 %v83
    %v173 = vunpack.c.l.b16 %v84
    %v174 = vunpack.c.h.b16 %v84
    %v175 = vunpack.c.l.b16 %v85
    %v176 = vunpack.c.h.b16 %v85
    %v177 = vunpack.c.l.b16 %v86
    %v178 = vunpack.c.h.b16 %v86
    %v179 = vunpack.c.l.b16 %v87
    %v180 = vunpack.c.h.b16 %v87
    %v181 = vunpack.c.l.b16 %v88
    %v182 = vunpack.c.h.b16 %v88
    %v183 = vunpack.c.l.b16 %v89
    %v184 = vunpack.c.h.b16 %v89
    %v185 = vunpack.c.l.b16 %v90
    %v186 = vunpack.c.h.b16 %v90
    %v187 = vunpack.c.l.b16 %v91
    %v188 = vunpack.c.h.b16 %v91
    %v189 = vunpack.c.l.b16 %v92
    %v190 = vunpack.c.h.b16 %v92
    %v191 = vunpack.c.l.b16 %v93
    %v192 = vunpack.c.h.b16 %v93
    %v193 = vunpack.c.l.b16 %v94
    %v194 = vunpack.c.h.b16 %v94
    %v195 = vunpack.c.l.b16 %v95
    %v196 = vunpack.c.h.b16 %v95
    %v197 = vunpack.c.l.b16 %v96
    %v198 = vunpack.c.h.b16 %v96
    %v199 = vunpack.c.l.b16 %v97
    %v200 = vunpack.c.h.b16 %v97
    %v201 = vpack.c.b16 %v141, %v137
    %v202 = vpack.c.b16 %v142, %v138
    %v203 = vpack.c.b16 %v143, %v139
    %v204 = vpack.c.b16 %v144, %v140
    %v205 = vpack.c.b16 %v149, %v145
    %v206 = vpack.c.b16 %v150, %v146
    %v207 = vpack.c.b16 %v151, %v147
    %v208 = vpack.c.b16 %v152, %v148
    %v209 = vpack.c.b16 %v157, %v153
    %v210 = vpack.c.b16 %v158, %v154
    %v211 = vpack.c.b16 %v159, %v155
    %v212 = vpack.c.b16 %v160, %v156
    %v213 = vpack.c.b16 %v165, %v161
    %v214 = vpack.c.b16 %v166, %v162
    %v215 = vpack.c.b16 %v167, %v163
    %v216 = vpack.c.b16 %v168, %v164
    %v217 = vpack.c.b16 %v173, %v169
    %v218 = vpack.c.b16 %v174, %v170
    %v219 = vpack.c.b16 %v175, %v171
    %v220 = vpack.c.b16 %v176, %v172
    %v221 = vpack.c.b16 %v181, %v177
    %v222 = vpack.c.b16 %v182, %v178
    %v223 = vpack.c.b16 %v183, %v179
    %v224 = vpack.c.b16 %v184, %v180
    %v225 = vpack.c.b16 %v189, %v185
    %v226 = vpack.c.b16 %v190, %v186
    %v227 = vpack.c.b16 %v191, %v187
    %v228 = vpack.c.b16 %v192, %v188
    %v229 = vpack.c.b16 %v197, %v193
    %v230 = vpack.c.b16 %v198, %v194
    %v231 = vpack.c.b16 %v199, %v195
    %v232 = vpack.c.b16 %v200, %v196
    %265 = vmatprep.subr.bf16.mxu0 %v202
    %266 = vmatpush1.bf16.msra.mxu0 %v201
    %267 = vmatprep.subr.bf16.mxu0 %v206
    %268 = vmatpush1.bf16.msra.mxu0 %v205
    %269 = vmatprep.subr.bf16.mxu0 %v210
    %270 = vmatpush1.bf16.msra.mxu0 %v209
    %271 = vmatprep.subr.bf16.mxu0 %v214
    %272 = vmatpush1.bf16.msra.mxu0 %v213
    %273 = vmatprep.subr.bf16.mxu0 %v218
    %274 = vmatpush1.bf16.msra.mxu0 %v217
    %275 = vmatprep.subr.bf16.mxu0 %v222
    %276 = vmatpush1.bf16.msra.mxu0 %v221
    %277 = vmatprep.subr.bf16.mxu0 %v226
    %278 = vmatpush1.bf16.msra.mxu0 %v225
    %279 = vmatprep.subr.bf16.mxu0 %v230
    %280 = vmatpush1.bf16.msra.mxu0 %v229
    %281 = vmatprep.subr.bf16.mxu0 0
    %282 = vmatpush1.bf16.msra.mxu0 0
    %283 = vmatprep.subr.bf16.mxu0 0
    %284 = vmatpush1.bf16.msra.mxu0 0
    %285 = vmatprep.subr.bf16.mxu0 0
    %286 = vmatpush1.bf16.msra.mxu0 0
    %287 = vmatprep.subr.bf16.mxu0 0
    %288 = vmatpush1.bf16.msra.mxu0 0
    %289 = vmatprep.subr.bf16.mxu0 0
    %290 = vmatpush1.bf16.msra.mxu0 0
    %291 = vmatprep.subr.bf16.mxu0 0
    %292 = vmatpush1.bf16.msra.mxu0 0
    %293 = vmatprep.subr.bf16.mxu0 0
    %294 = vmatpush1.bf16.msra.mxu0 0
    %295 = vmatprep.subr.bf16.mxu0 0
    %296 = vmatpush1.bf16.msra.mxu0 0
    %297 = vmatprep.mubr.bf16.mxu0 0
    %298 = vmatmul.mubr.bf16.gmra.mrb[0].mxu0 %v104
    %v299 = vpop.f32.mrb[0].mxu0
    %v300 = vadd.f32 0.0, %v299
    %v301 = vpop.f32.mrb[0].mxu0
    %v302 = vadd.f32 0.0, %v301
    %v303 = vpop.f32.mrb[0].mxu0
    %v304 = vpop.f32.mrb[0].mxu0
    %305 = vdwg.mxu0
    %306 = vmatprep.subr.bf16.mxu0 %v204
    %307 = vmatpush1.bf16.msra.mxu0 %v203
    %308 = vmatprep.subr.bf16.mxu0 %v208
    %309 = vmatpush1.bf16.msra.mxu0 %v207
    %310 = vmatprep.subr.bf16.mxu0 %v212
    %311 = vmatpush1.bf16.msra.mxu0 %v211
    %312 = vmatprep.subr.bf16.mxu0 %v216
    %313 = vmatpush1.bf16.msra.mxu0 %v215
    %314 = vmatprep.subr.bf16.mxu0 %v220
    %315 = vmatpush1.bf16.msra.mxu0 %v219
    %316 = vmatprep.subr.bf16.mxu0 %v224
    %317 = vmatpush1.bf16.msra.mxu0 %v223
    %318 = vmatprep.subr.bf16.mxu0 %v228
    %319 = vmatpush1.bf16.msra.mxu0 %v227
    %320 = vmatprep.subr.bf16.mxu0 %v232
    %321 = vmatpush1.bf16.msra.mxu0 %v231
    %322 = vmatprep.subr.bf16.mxu0 0
    %323 = vmatpush1.bf16.msra.mxu0 0
    %324 = vmatprep.subr.bf16.mxu0 0
    %325 = vmatpush1.bf16.msra.mxu0 0
    %326 = vmatprep.subr.bf16.mxu0 0
    %327 = vmatpush1.bf16.msra.mxu0 0
    %328 = vmatprep.subr.bf16.mxu0 0
    %329 = vmatpush1.bf16.msra.mxu0 0
    %330 = vmatprep.subr.bf16.mxu0 0
    %331 = vmatpush1.bf16.msra.mxu0 0
    %332 = vmatprep.subr.bf16.mxu0 0
    %333 = vmatpush1.bf16.msra.mxu0 0
    %334 = vmatprep.subr.bf16.mxu0 0
    %335 = vmatpush1.bf16.msra.mxu0 0
    %336 = vmatprep.subr.bf16.mxu0 0
    %337 = vmatpush1.bf16.msra.mxu0 0
    %338 = vmatprep.mubr.bf16.mxu0 0
    %339 = vmatmul.mubr.bf16.gmra.mrb[0].mxu0 %v104
    %v340 = vpop.f32.mrb[0].mxu0
    %v341 = vadd.f32 0.0, %v340
    %v342 = vpop.f32.mrb[0].mxu0
    %v343 = vadd.f32 0.0, %v342
    %v344 = vpop.f32.mrb[0].mxu0
    %v345 = vpop.f32.mrb[0].mxu0
    %346 = vdwg.mxu0
    %v347 = vadd.f32 %v100, %v300
    %v348 = vadd.f32 %v101, %v302
    %v349 = vadd.f32 %v102, %v341
    %v350 = vadd.f32 %v103, %v343
    %v351 = vsub.f32 0.0, %v347
    %v352 = vsub.f32 0.0, %v348
    %v353 = vsub.f32 0.0, %v349
    %v354 = vmul.f32 %v351, 1.442695
    %v355 = vpow.pop %v354
    %v356 = vmul.f32 %v352, 1.442695
    %v357 = vpow.pop %v356
    %v358 = vmul.f32 %v353, 1.442695
    %v359 = vpow.pop %v358
    %v360 = vadd.f32 %v355, 1.0
    %v361 = vadd.f32 %v357, 1.0
    %v362 = vadd.f32 %v359, 1.0
    %v363 = vrcp.pop %v360
    %v364 = vrcp.pop %v361
    %v365 = vrcp.pop %v362
    %v366 = vtanh.pop %v350
    %v367 = vmul.f32 %v364, %v99
    %v368 = vmul.f32 %v363, %v366
    %v369 = vadd.f32 %v367, %v368
    %v370 = vtanh.pop %v369
    %v371 = vmul.f32 %v365, %v370
    %s372 = scalar_lea.vmem [#allocation4], 32
    %v373 = vld [vmem:[%s372] sm:$0xff]
    %v374 = vld [vmem:[%s372 + $0x8] sm:$0xff]
    %v375 = vld [vmem:[%s372 + $0x10] sm:$0xff]
    %v376 = vld [vmem:[%s372 + $0x18] sm:$0xff]
    %v377 = vpack.c.bf16 %v371, %v371
    %378 = vmatprep.subr.bf16.mxu0 %v202
    %379 = vmatpush1.bf16.msra.mxu0 %v201
    %380 = vmatprep.subr.bf16.mxu0 %v206
    %381 = vmatpush1.bf16.msra.mxu0 %v205
    %382 = vmatprep.subr.bf16.mxu0 %v210
    %383 = vmatpush1.bf16.msra.mxu0 %v209
    %384 = vmatprep.subr.bf16.mxu0 %v214
    %385 = vmatpush1.bf16.msra.mxu0 %v213
    %386 = vmatprep.subr.bf16.mxu0 %v218
    %387 = vmatpush1.bf16.msra.mxu0 %v217
    %388 = vmatprep.subr.bf16.mxu0 %v222
    %389 = vmatpush1.bf16.msra.mxu0 %v221
    %390 = vmatprep.subr.bf16.mxu0 %v226
    %391 = vmatpush1.bf16.msra.mxu0 %v225
    %392 = vmatprep.subr.bf16.mxu0 %v230
    %393 = vmatpush1.bf16.msra.mxu0 %v229
    %394 = vmatprep.subr.bf16.mxu0 0
    %395 = vmatpush1.bf16.msra.mxu0 0
    %396 = vmatprep.subr.bf16.mxu0 0
    %397 = vmatpush1.bf16.msra.mxu0 0
    %398 = vmatprep.subr.bf16.mxu0 0
    %399 = vmatpush1.bf16.msra.mxu0 0
    %400 = vmatprep.subr.bf16.mxu0 0
    %401 = vmatpush1.bf16.msra.mxu0 0
    %402 = vmatprep.subr.bf16.mxu0 0
    %403 = vmatpush1.bf16.msra.mxu0 0
    %404 = vmatprep.subr.bf16.mxu0 0
    %405 = vmatpush1.bf16.msra.mxu0 0
    %406 = vmatprep.subr.bf16.mxu0 0
    %407 = vmatpush1.bf16.msra.mxu0 0
    %408 = vmatprep.subr.bf16.mxu0 0
    %409 = vmatpush1.bf16.msra.mxu0 0
    %410 = vmatprep.mubr.bf16.mxu0 0
    %411 = vmatmul.mubr.bf16.gmra.mrb[0].mxu0 %v377
    %v412 = vpop.f32.mrb[0].mxu0
    %v413 = vadd.f32 0.0, %v412
    %v414 = vpop.f32.mrb[0].mxu0
    %v415 = vadd.f32 0.0, %v414
    %v416 = vpop.f32.mrb[0].mxu0
    %v417 = vpop.f32.mrb[0].mxu0
    %418 = vdwg.mxu0
    %419 = vmatprep.subr.bf16.mxu0 %v204
    %420 = vmatpush1.bf16.msra.mxu0 %v203
    %421 = vmatprep.subr.bf16.mxu0 %v208
    %422 = vmatpush1.bf16.msra.mxu0 %v207
    %423 = vmatprep.subr.bf16.mxu0 %v212
    %424 = vmatpush1.bf16.msra.mxu0 %v211
    %425 = vmatprep.subr.bf16.mxu0 %v216
    %426 = vmatpush1.bf16.msra.mxu0 %v215
    %427 = vmatprep.subr.bf16.mxu0 %v220
    %428 = vmatpush1.bf16.msra.mxu0 %v219
    %429 = vmatprep.subr.bf16.mxu0 %v224
    %430 = vmatpush1.bf16.msra.mxu0 %v223
    %431 = vmatprep.subr.bf16.mxu0 %v228
    %432 = vmatpush1.bf16.msra.mxu0 %v227
    %433 = vmatprep.subr.bf16.mxu0 %v232
    %434 = vmatpush1.bf16.msra.mxu0 %v231
    %435 = vmatprep.subr.bf16.mxu0 0
    %436 = vmatpush1.bf16.msra.mxu0 0
    %437 = vmatprep.subr.bf16.mxu0 0
    %438 = vmatpush1.bf16.msra.mxu0 0
    %439 = vmatprep.subr.bf16.mxu0 0
    %440 = vmatpush1.bf16.msra.mxu0 0
    %441 = vmatprep.subr.bf16.mxu0 0
    %442 = vmatpush1.bf16.msra.mxu0 0
    %443 = vmatprep.subr.bf16.mxu0 0
    %444 = vmatpush1.bf16.msra.mxu0 0
    %445 = vmatprep.subr.bf16.mxu0 0
    %446 = vmatpush1.bf16.msra.mxu0 0
    %447 = vmatprep.subr.bf16.mxu0 0
    %448 = vmatpush1.bf16.msra.mxu0 0
    %449 = vmatprep.subr.bf16.mxu0 0
    %450 = vmatpush1.bf16.msra.mxu0 0
    %451 = vmatprep.mubr.bf16.mxu0 0
    %452 = vmatmul.mubr.bf16.gmra.mrb[0].mxu0 %v377
    %v453 = vpop.f32.mrb[0].mxu0
    %v454 = vadd.f32 0.0, %v453
    %v455 = vpop.f32.mrb[0].mxu0
    %v456 = vadd.f32 0.0, %v455
    %v457 = vpop.f32.mrb[0].mxu0
    %v458 = vpop.f32.mrb[0].mxu0
    %459 = vdwg.mxu0
    %v460 = vadd.f32 %v373, %v413
    %v461 = vadd.f32 %v374, %v415
    %v462 = vadd.f32 %v375, %v454
    %v463 = vadd.f32 %v376, %v456
    %v464 = vsub.f32 0.0, %v460
    %v465 = vsub.f32 0.0, %v461
    %v466 = vsub.f32 0.0, %v462
    %v467 = vmul.f32 %v464, 1.442695
    %v468 = vpow.pop %v467
    %v469 = vmul.f32 %v465, 1.442695
    %v470 = vpow.pop %v469
    %v471 = vmul.f32 %v466, 1.442695
    %v472 = vpow.pop %v471
    %v473 = vadd.f32 %v468, 1.0
    %v474 = vadd.f32 %v470, 1.0
    %v475 = vadd.f32 %v472, 1.0
    %v476 = vrcp.pop %v473
    %v477 = vrcp.pop %v474
    %v478 = vrcp.pop %v475
    %v479 = vtanh.pop %v463
    %v480 = vmul.f32 %v477, %v369
    %v481 = vmul.f32 %v476, %v479
    %v482 = vadd.f32 %v480, %v481
    %v483 = vtanh.pop %v482
    %v484 = vmul.f32 %v478, %v483
    %s485 = scalar_lea.vmem [#allocation4], 64
    %v486 = vld [vmem:[%s485] sm:$0xff]
    %v487 = vld [vmem:[%s485 + $0x8] sm:$0xff]
    %v488 = vld [vmem:[%s485 + $0x10] sm:$0xff]
    %v489 = vld [vmem:[%s485 + $0x18] sm:$0xff]
    %v490 = vpack.c.bf16 %v484, %v484
    %491 = vmatprep.subr.bf16.mxu0 %v202
    %492 = vmatpush1.bf16.msra.mxu0 %v201
    %493 = vmatprep.subr.bf16.mxu0 %v206
    %494 = vmatpush1.bf16.msra.mxu0 %v205
    %495 = vmatprep.subr.bf16.mxu0 %v210
    %496 = vmatpush1.bf16.msra.mxu0 %v209
    %497 = vmatprep.subr.bf16.mxu0 %v214
    %498 = vmatpush1.bf16.msra.mxu0 %v213
    %499 = vmatprep.subr.bf16.mxu0 %v218
    %500 = vmatpush1.bf16.msra.mxu0 %v217
    %501 = vmatprep.subr.bf16.mxu0 %v222
    %502 = vmatpush1.bf16.msra.mxu0 %v221
    %503 = vmatprep.subr.bf16.mxu0 %v226
    %504 = vmatpush1.bf16.msra.mxu0 %v225
    %505 = vmatprep.subr.bf16.mxu0 %v230
    %506 = vmatpush1.bf16.msra.mxu0 %v229
    %507 = vmatprep.subr.bf16.mxu0 0
    %508 = vmatpush1.bf16.msra.mxu0 0
    %509 = vmatprep.subr.bf16.mxu0 0
    %510 = vmatpush1.bf16.msra.mxu0 0
    %511 = vmatprep.subr.bf16.mxu0 0
    %512 = vmatpush1.bf16.msra.mxu0 0
    %513 = vmatprep.subr.bf16.mxu0 0
    %514 = vmatpush1.bf16.msra.mxu0 0
    %515 = vmatprep.subr.bf16.mxu0 0
    %516 = vmatpush1.bf16.msra.mxu0 0
    %517 = vmatprep.subr.bf16.mxu0 0
    %518 = vmatpush1.bf16.msra.mxu0 0
    %519 = vmatprep.subr.bf16.mxu0 0
    %520 = vmatpush1.bf16.msra.mxu0 0
    %521 = vmatprep.subr.bf16.mxu0 0
    %522 = vmatpush1.bf16.msra.mxu0 0
    %523 = vmatprep.mubr.bf16.mxu0 0
    %524 = vmatmul.mubr.bf16.gmra.mrb[0].mxu0 %v490
    %v525 = vpop.f32.mrb[0].mxu0
    %v526 = vadd.f32 0.0, %v525
    %v527 = vpop.f32.mrb[0].mxu0
    %v528 = vadd.f32 0.0, %v527
    %v529 = vpop.f32.mrb[0].mxu0
    %v530 = vpop.f32.mrb[0].mxu0
    %531 = vdwg.mxu0
    %532 = vmatprep.subr.bf16.mxu0 %v204
    %533 = vmatpush1.bf16.msra.mxu0 %v203
    %534 = vmatprep.subr.bf16.mxu0 %v208
    %535 = vmatpush1.bf16.msra.mxu0 %v207
    %536 = vmatprep.subr.bf16.mxu0 %v212
    %537 = vmatpush1.bf16.msra.mxu0 %v211
    %538 = vmatprep.subr.bf16.mxu0 %v216
    %539 = vmatpush1.bf16.msra.mxu0 %v215
    %540 = vmatprep.subr.bf16.mxu0 %v220
    %541 = vmatpush1.bf16.msra.mxu0 %v219
    %542 = vmatprep.subr.bf16.mxu0 %v224
    %543 = vmatpush1.bf16.msra.mxu0 %v223
    %544 = vmatprep.subr.bf16.mxu0 %v228
    %545 = vmatpush1.bf16.msra.mxu0 %v227
    %546 = vmatprep.subr.bf16.mxu0 %v232
    %547 = vmatpush1.bf16.msra.mxu0 %v231
    %548 = vmatprep.subr.bf16.mxu0 0
    %549 = vmatpush1.bf16.msra.mxu0 0
    %550 = vmatprep.subr.bf16.mxu0 0
    %551 = vmatpush1.bf16.msra.mxu0 0
    %552 = vmatprep.subr.bf16.mxu0 0
    %553 = vmatpush1.bf16.msra.mxu0 0
    %554 = vmatprep.subr.bf16.mxu0 0
    %555 = vmatpush1.bf16.msra.mxu0 0
    %556 = vmatprep.subr.bf16.mxu0 0
    %557 = vmatpush1.bf16.msra.mxu0 0
    %558 = vmatprep.subr.bf16.mxu0 0
    %559 = vmatpush1.bf16.msra.mxu0 0
    %560 = vmatprep.subr.bf16.mxu0 0
    %561 = vmatpush1.bf16.msra.mxu0 0
    %562 = vmatprep.subr.bf16.mxu0 0
    %563 = vmatpush1.bf16.msra.mxu0 0
    %564 = vmatprep.mubr.bf16.mxu0 0
    %565 = vmatmul.mubr.bf16.gmra.mrb[0].mxu0 %v490
    %v566 = vpop.f32.mrb[0].mxu0
    %v567 = vadd.f32 0.0, %v566
    %v568 = vpop.f32.mrb[0].mxu0
    %v569 = vadd.f32 0.0, %v568
    %v570 = vpop.f32.mrb[0].mxu0
    %v571 = vpop.f32.mrb[0].mxu0
    %572 = vdwg.mxu0
    %v573 = vadd.f32 %v486, %v526
    %v574 = vadd.f32 %v487, %v528
    %v575 = vadd.f32 %v488, %v567
    %v576 = vadd.f32 %v489, %v569
    %v577 = vsub.f32 0.0, %v573
    %v578 = vsub.f32 0.0, %v574
    %v579 = vsub.f32 0.0, %v575
    %v580 = vmul.f32 %v577, 1.442695
    %v581 = vpow.pop %v580
    %v582 = vmul.f32 %v578, 1.442695
    %v583 = vpow.pop %v582
    %v584 = vmul.f32 %v579, 1.442695
    %v585 = vpow.pop %v584
    %v586 = vadd.f32 %v581, 1.0
    %v587 = vadd.f32 %v583, 1.0
    %v588 = vadd.f32 %v585, 1.0
    %v589 = vrcp.pop %v586
    %v590 = vrcp.pop %v587
    %v591 = vrcp.pop %v588
    %v592 = vtanh.pop %v576
    %v593 = vmul.f32 %v590, %v482
    %v594 = vmul.f32 %v589, %v592
    %v595 = vadd.f32 %v593, %v594
    %v596 = vtanh.pop %v595
    %v597 = vmul.f32 %v591, %v596
    %s598 = scalar_lea.vmem [#allocation4], 96
    %v599 = vld [vmem:[%s598] sm:$0xff]
    %v600 = vld [vmem:[%s598 + $0x8] sm:$0xff]
    %v601 = vld [vmem:[%s598 + $0x10] sm:$0xff]
    %v602 = vld [vmem:[%s598 + $0x18] sm:$0xff]
    %v603 = vpack.c.bf16 %v597, %v597
    %604 = vmatprep.subr.bf16.mxu0 %v202
    %605 = vmatpush1.bf16.msra.mxu0 %v201
    %606 = vmatprep.subr.bf16.mxu0 %v206
    %607 = vmatpush1.bf16.msra.mxu0 %v205
    %608 = vmatprep.subr.bf16.mxu0 %v210
    %609 = vmatpush1.bf16.msra.mxu0 %v209
    %610 = vmatprep.subr.bf16.mxu0 %v214
    %611 = vmatpush1.bf16.msra.mxu0 %v213
    %612 = vmatprep.subr.bf16.mxu0 %v218
    %613 = vmatpush1.bf16.msra.mxu0 %v217
    %614 = vmatprep.subr.bf16.mxu0 %v222
    %615 = vmatpush1.bf16.msra.mxu0 %v221
    %616 = vmatprep.subr.bf16.mxu0 %v226
    %617 = vmatpush1.bf16.msra.mxu0 %v225
    %618 = vmatprep.subr.bf16.mxu0 %v230
    %619 = vmatpush1.bf16.msra.mxu0 %v229
    %620 = vmatprep.subr.bf16.mxu0 0
    %621 = vmatpush1.bf16.msra.mxu0 0
    %622 = vmatprep.subr.bf16.mxu0 0
    %623 = vmatpush1.bf16.msra.mxu0 0
    %624 = vmatprep.subr.bf16.mxu0 0
    %625 = vmatpush1.bf16.msra.mxu0 0
    %626 = vmatprep.subr.bf16.mxu0 0
    %627 = vmatpush1.bf16.msra.mxu0 0
    %628 = vmatprep.subr.bf16.mxu0 0
    %629 = vmatpush1.bf16.msra.mxu0 0
    %630 = vmatprep.subr.bf16.mxu0 0
    %631 = vmatpush1.bf16.msra.mxu0 0
    %632 = vmatprep.subr.bf16.mxu0 0
    %633 = vmatpush1.bf16.msra.mxu0 0
    %634 = vmatprep.subr.bf16.mxu0 0
    %635 = vmatpush1.bf16.msra.mxu0 0
    %636 = vmatprep.mubr.bf16.mxu0 0
    %637 = vmatmul.mubr.bf16.gmra.mrb[0].mxu0 %v603
    %v638 = vpop.f32.mrb[0].mxu0
    %v639 = vadd.f32 0.0, %v638
    %v640 = vpop.f32.mrb[0].mxu0
    %v641 = vadd.f32 0.0, %v640
    %v642 = vpop.f32.mrb[0].mxu0
    %v643 = vpop.f32.mrb[0].mxu0
    %644 = vdwg.mxu0
    %645 = vmatprep.subr.bf16.mxu0 %v204
    %646 = vmatpush1.bf16.msra.mxu0 %v203
    %647 = vmatprep.subr.bf16.mxu0 %v208
    %648 = vmatpush1.bf16.msra.mxu0 %v207
    %649 = vmatprep.subr.bf16.mxu0 %v212
    %650 = vmatpush1.bf16.msra.mxu0 %v211
    %651 = vmatprep.subr.bf16.mxu0 %v216
    %652 = vmatpush1.bf16.msra.mxu0 %v215
    %653 = vmatprep.subr.bf16.mxu0 %v220
    %654 = vmatpush1.bf16.msra.mxu0 %v219
    %655 = vmatprep.subr.bf16.mxu0 %v224
    %656 = vmatpush1.bf16.msra.mxu0 %v223
    %657 = vmatprep.subr.bf16.mxu0 %v228
    %658 = vmatpush1.bf16.msra.mxu0 %v227
    %659 = vmatprep.subr.bf16.mxu0 %v232
    %660 = vmatpush1.bf16.msra.mxu0 %v231
    %661 = vmatprep.subr.bf16.mxu0 0
    %662 = vmatpush1.bf16.msra.mxu0 0
    %663 = vmatprep.subr.bf16.mxu0 0
    %664 = vmatpush1.bf16.msra.mxu0 0
    %665 = vmatprep.subr.bf16.mxu0 0
    %666 = vmatpush1.bf16.msra.mxu0 0
    %667 = vmatprep.subr.bf16.mxu0 0
    %668 = vmatpush1.bf16.msra.mxu0 0
    %669 = vmatprep.subr.bf16.mxu0 0
    %670 = vmatpush1.bf16.msra.mxu0 0
    %671 = vmatprep.subr.bf16.mxu0 0
    %672 = vmatpush1.bf16.msra.mxu0 0
    %673 = vmatprep.subr.bf16.mxu0 0
    %674 = vmatpush1.bf16.msra.mxu0 0
    %675 = vmatprep.subr.bf16.mxu0 0
    %676 = vmatpush1.bf16.msra.mxu0 0
    %677 = vmatprep.mubr.bf16.mxu0 0
    %678 = vmatmul.mubr.bf16.gmra.mrb[0].mxu0 %v603
    %v679 = vpop.f32.mrb[0].mxu0
    %v680 = vadd.f32 0.0, %v679
    %v681 = vpop.f32.mrb[0].mxu0
    %v682 = vadd.f32 0.0, %v681
    %v683 = vpop.f32.mrb[0].mxu0
    %v684 = vpop.f32.mrb[0].mxu0
    %685 = vdwg.mxu0
    %v686 = vadd.f32 %v599, %v639
    %v687 = vadd.f32 %v600, %v641
    %v688 = vadd.f32 %v601, %v680
    %v689 = vadd.f32 %v602, %v682
    %v690 = vsub.f32 0.0, %v686
    %v691 = vsub.f32 0.0, %v687
    %v692 = vsub.f32 0.0, %v688
    %v693 = vmul.f32 %v690, 1.442695
    %v694 = vpow.pop %v693
    %v695 = vmul.f32 %v691, 1.442695
    %v696 = vpow.pop %v695
    %v697 = vmul.f32 %v692, 1.442695
    %v698 = vpow.pop %v697
    %v699 = vadd.f32 %v694, 1.0
    %v700 = vadd.f32 %v696, 1.0
    %v701 = vadd.f32 %v698, 1.0
    %v702 = vrcp.pop %v699
    %v703 = vrcp.pop %v700
    %v704 = vrcp.pop %v701
    %v705 = vtanh.pop %v689
    %v706 = vmul.f32 %v703, %v595
    %v707 = vmul.f32 %v702, %v705
    %v708 = vadd.f32 %v706, %v707
    %v709 = vtanh.pop %v708
    %v710 = vmul.f32 %v704, %v709
    %s711 = scalar_lea.vmem [#allocation4], 128
    %v712 = vld [vmem:[%s711] sm:$0xff]
    %v713 = vld [vmem:[%s711 + $0x8] sm:$0xff]
    %v714 = vld [vmem:[%s711 + $0x10] sm:$0xff]
    %v715 = vld [vmem:[%s711 + $0x18] sm:$0xff]
    %v716 = vpack.c.bf16 %v710, %v710
    %717 = vmatprep.subr.bf16.mxu0 %v202
    %718 = vmatpush1.bf16.msra.mxu0 %v201
    %719 = vmatprep.subr.bf16.mxu0 %v206
    %720 = vmatpush1.bf16.msra.mxu0 %v205
    %721 = vmatprep.subr.bf16.mxu0 %v210
    %722 = vmatpush1.bf16.msra.mxu0 %v209
    %723 = vmatprep.subr.bf16.mxu0 %v214
    %724 = vmatpush1.bf16.msra.mxu0 %v213
    %725 = vmatprep.subr.bf16.mxu0 %v218
    %726 = vmatpush1.bf16.msra.mxu0 %v217
    %727 = vmatprep.subr.bf16.mxu0 %v222
    %728 = vmatpush1.bf16.msra.mxu0 %v221
    %729 = vmatprep.subr.bf16.mxu0 %v226
    %730 = vmatpush1.bf16.msra.mxu0 %v225
    %731 = vmatprep.subr.bf16.mxu0 %v230
    %732 = vmatpush1.bf16.msra.mxu0 %v229
    %733 = vmatprep.subr.bf16.mxu0 0
    %734 = vmatpush1.bf16.msra.mxu0 0
    %735 = vmatprep.subr.bf16.mxu0 0
    %736 = vmatpush1.bf16.msra.mxu0 0
    %737 = vmatprep.subr.bf16.mxu0 0
    %738 = vmatpush1.bf16.msra.mxu0 0
    %739 = vmatprep.subr.bf16.mxu0 0
    %740 = vmatpush1.bf16.msra.mxu0 0
    %741 = vmatprep.subr.bf16.mxu0 0
    %742 = vmatpush1.bf16.msra.mxu0 0
    %743 = vmatprep.subr.bf16.mxu0 0
    %744 = vmatpush1.bf16.msra.mxu0 0
    %745 = vmatprep.subr.bf16.mxu0 0
    %746 = vmatpush1.bf16.msra.mxu0 0
    %747 = vmatprep.subr.bf16.mxu0 0
    %748 = vmatpush1.bf16.msra.mxu0 0
    %749 = vmatprep.mubr.bf16.mxu0 0
    %750 = vmatmul.mubr.bf16.gmra.mrb[0].mxu0 %v716
    %v751 = vpop.f32.mrb[0].mxu0
    %v752 = vadd.f32 0.0, %v751
    %v753 = vpop.f32.mrb[0].mxu0
    %v754 = vadd.f32 0.0, %v753
    %v755 = vpop.f32.mrb[0].mxu0
    %v756 = vpop.f32.mrb[0].mxu0
    %757 = vdwg.mxu0
    %758 = vmatprep.subr.bf16.mxu0 %v204
    %759 = vmatpush1.bf16.msra.mxu0 %v203
    %760 = vmatprep.subr.bf16.mxu0 %v208
    %761 = vmatpush1.bf16.msra.mxu0 %v207
    %762 = vmatprep.subr.bf16.mxu0 %v212
    %763 = vmatpush1.bf16.msra.mxu0 %v211
    %764 = vmatprep.subr.bf16.mxu0 %v216
    %765 = vmatpush1.bf16.msra.mxu0 %v215
    %766 = vmatprep.subr.bf16.mxu0 %v220
    %767 = vmatpush1.bf16.msra.mxu0 %v219
    %768 = vmatprep.subr.bf16.mxu0 %v224
    %769 = vmatpush1.bf16.msra.mxu0 %v223
    %770 = vmatprep.subr.bf16.mxu0 %v228
    %771 = vmatpush1.bf16.msra.mxu0 %v227
    %772 = vmatprep.subr.bf16.mxu0 %v232
    %773 = vmatpush1.bf16.msra.mxu0 %v231
    %774 = vmatprep.subr.bf16.mxu0 0
    %775 = vmatpush1.bf16.msra.mxu0 0
    %776 = vmatprep.subr.bf16.mxu0 0
    %777 = vmatpush1.bf16.msra.mxu0 0
    %778 = vmatprep.subr.bf16.mxu0 0
    %779 = vmatpush1.bf16.msra.mxu0 0
    %780 = vmatprep.subr.bf16.mxu0 0
    %781 = vmatpush1.bf16.msra.mxu0 0
    %782 = vmatprep.subr.bf16.mxu0 0
    %783 = vmatpush1.bf16.msra.mxu0 0
    %784 = vmatprep.subr.bf16.mxu0 0
    %785 = vmatpush1.bf16.msra.mxu0 0
    %786 = vmatprep.subr.bf16.mxu0 0
    %787 = vmatpush1.bf16.msra.mxu0 0
    %788 = vmatprep.subr.bf16.mxu0 0
    %789 = vmatpush1.bf16.msra.mxu0 0
    %790 = vmatprep.mubr.bf16.mxu0 0
    %791 = vmatmul.mubr.bf16.gmra.mrb[0].mxu0 %v716
    %v792 = vpop.f32.mrb[0].mxu0
    %v793 = vadd.f32 0.0, %v792
    %v794 = vpop.f32.mrb[0].mxu0
    %v795 = vadd.f32 0.0, %v794
    %v796 = vpop.f32.mrb[0].mxu0
    %v797 = vpop.f32.mrb[0].mxu0
    %798 = vdwg.mxu0
    %v799 = vadd.f32 %v712, %v752
    %v800 = vadd.f32 %v713, %v754
    %v801 = vadd.f32 %v714, %v793
    %v802 = vadd.f32 %v715, %v795
    %v803 = vsub.f32 0.0, %v799
    %v804 = vsub.f32 0.0, %v800
    %v805 = vsub.f32 0.0, %v801
    %v806 = vmul.f32 %v803, 1.442695
    %v807 = vpow.pop %v806
    %v808 = vmul.f32 %v804, 1.442695
    %v809 = vpow.pop %v808
    %v810 = vmul.f32 %v805, 1.442695
    %v811 = vpow.pop %v810
    %v812 = vadd.f32 %v807, 1.0
    %v813 = vadd.f32 %v809, 1.0
    %v814 = vadd.f32 %v811, 1.0
    %v815 = vrcp.pop %v812
    %v816 = vrcp.pop %v813
    %v817 = vrcp.pop %v814
    %v818 = vtanh.pop %v802
    %v819 = vmul.f32 %v816, %v708
    %v820 = vmul.f32 %v815, %v818
    %v821 = vadd.f32 %v819, %v820
    %v822 = vtanh.pop %v821
    %v823 = vmul.f32 %v817, %v822
    %s824 = scalar_lea.vmem [#allocation4], 160
    %v825 = vld [vmem:[%s824] sm:$0xff]
    %v826 = vld [vmem:[%s824 + $0x8] sm:$0xff]
    %v827 = vld [vmem:[%s824 + $0x10] sm:$0xff]
    %v828 = vld [vmem:[%s824 + $0x18] sm:$0xff]
    %v829 = vpack.c.bf16 %v823, %v823
    %830 = vmatprep.subr.bf16.mxu0 %v202
    %831 = vmatpush1.bf16.msra.mxu0 %v201
    %832 = vmatprep.subr.bf16.mxu0 %v206
    %833 = vmatpush1.bf16.msra.mxu0 %v205
    %834 = vmatprep.subr.bf16.mxu0 %v210
    %835 = vmatpush1.bf16.msra.mxu0 %v209
    %836 = vmatprep.subr.bf16.mxu0 %v214
    %837 = vmatpush1.bf16.msra.mxu0 %v213
    %838 = vmatprep.subr.bf16.mxu0 %v218
    %839 = vmatpush1.bf16.msra.mxu0 %v217
    %840 = vmatprep.subr.bf16.mxu0 %v222
    %841 = vmatpush1.bf16.msra.mxu0 %v221
    %842 = vmatprep.subr.bf16.mxu0 %v226
    %843 = vmatpush1.bf16.msra.mxu0 %v225
    %844 = vmatprep.subr.bf16.mxu0 %v230
    %845 = vmatpush1.bf16.msra.mxu0 %v229
    %846 = vmatprep.subr.bf16.mxu0 0
    %847 = vmatpush1.bf16.msra.mxu0 0
    %848 = vmatprep.subr.bf16.mxu0 0
    %849 = vmatpush1.bf16.msra.mxu0 0
    %850 = vmatprep.subr.bf16.mxu0 0
    %851 = vmatpush1.bf16.msra.mxu0 0
    %852 = vmatprep.subr.bf16.mxu0 0
    %853 = vmatpush1.bf16.msra.mxu0 0
    %854 = vmatprep.subr.bf16.mxu0 0
    %855 = vmatpush1.bf16.msra.mxu0 0
    %856 = vmatprep.subr.bf16.mxu0 0
    %857 = vmatpush1.bf16.msra.mxu0 0
    %858 = vmatprep.subr.bf16.mxu0 0
    %859 = vmatpush1.bf16.msra.mxu0 0
    %860 = vmatprep.subr.bf16.mxu0 0
    %861 = vmatpush1.bf16.msra.mxu0 0
    %862 = vmatprep.mubr.bf16.mxu0 0
    %863 = vmatmul.mubr.bf16.gmra.mrb[0].mxu0 %v829
    %v864 = vpop.f32.mrb[0].mxu0
    %v865 = vadd.f32 0.0, %v864
    %v866 = vpop.f32.mrb[0].mxu0
    %v867 = vadd.f32 0.0, %v866
    %v868 = vpop.f32.mrb[0].mxu0
    %v869 = vpop.f32.mrb[0].mxu0
    %870 = vdwg.mxu0
    %871 = vmatprep.subr.bf16.mxu0 %v204
    %872 = vmatpush1.bf16.msra.mxu0 %v203
    %873 = vmatprep.subr.bf16.mxu0 %v208
    %874 = vmatpush1.bf16.msra.mxu0 %v207
    %875 = vmatprep.subr.bf16.mxu0 %v212
    %876 = vmatpush1.bf16.msra.mxu0 %v211
    %877 = vmatprep.subr.bf16.mxu0 %v216
    %878 = vmatpush1.bf16.msra.mxu0 %v215
    %879 = vmatprep.subr.bf16.mxu0 %v220
    %880 = vmatpush1.bf16.msra.mxu0 %v219
    %881 = vmatprep.subr.bf16.mxu0 %v224
    %882 = vmatpush1.bf16.msra.mxu0 %v223
    %883 = vmatprep.subr.bf16.mxu0 %v228
    %884 = vmatpush1.bf16.msra.mxu0 %v227
    %885 = vmatprep.subr.bf16.mxu0 %v232
    %886 = vmatpush1.bf16.msra.mxu0 %v231
    %887 = vmatprep.subr.bf16.mxu0 0
    %888 = vmatpush1.bf16.msra.mxu0 0
    %889 = vmatprep.subr.bf16.mxu0 0
    %890 = vmatpush1.bf16.msra.mxu0 0
    %891 = vmatprep.subr.bf16.mxu0 0
    %892 = vmatpush1.bf16.msra.mxu0 0
    %893 = vmatprep.subr.bf16.mxu0 0
    %894 = vmatpush1.bf16.msra.mxu0 0
    %895 = vmatprep.subr.bf16.mxu0 0
    %896 = vmatpush1.bf16.msra.mxu0 0
    %897 = vmatprep.subr.bf16.mxu0 0
    %898 = vmatpush1.bf16.msra.mxu0 0
    %899 = vmatprep.subr.bf16.mxu0 0
    %900 = vmatpush1.bf16.msra.mxu0 0
    %901 = vmatprep.subr.bf16.mxu0 0
    %902 = vmatpush1.bf16.msra.mxu0 0
    %903 = vmatprep.mubr.bf16.mxu0 0
    %904 = vmatmul.mubr.bf16.gmra.mrb[0].mxu0 %v829
    %v905 = vpop.f32.mrb[0].mxu0
    %v906 = vadd.f32 0.0, %v905
    %v907 = vpop.f32.mrb[0].mxu0
    %v908 = vadd.f32 0.0, %v907
    %v909 = vpop.f32.mrb[0].mxu0
    %v910 = vpop.f32.mrb[0].mxu0
    %911 = vdwg.mxu0
    %v912 = vadd.f32 %v825, %v865
    %v913 = vadd.f32 %v826, %v867
    %v914 = vadd.f32 %v827, %v906
    %v915 = vadd.f32 %v828, %v908
    %v916 = vsub.f32 0.0, %v912
    %v917 = vsub.f32 0.0, %v913
    %v918 = vsub.f32 0.0, %v914
    %v919 = vmul.f32 %v916, 1.442695
    %v920 = vpow.pop %v919
    %v921 = vmul.f32 %v917, 1.442695
    %v922 = vpow.pop %v921
    %v923 = vmul.f32 %v918, 1.442695
    %v924 = vpow.pop %v923
    %v925 = vadd.f32 %v920, 1.0
    %v926 = vadd.f32 %v922, 1.0
    %v927 = vadd.f32 %v924, 1.0
    %v928 = vrcp.pop %v925
    %v929 = vrcp.pop %v926
    %v930 = vrcp.pop %v927
    %v931 = vtanh.pop %v915
    %v932 = vmul.f32 %v929, %v821
    %v933 = vmul.f32 %v928, %v931
    %v934 = vadd.f32 %v932, %v933
    %v935 = vtanh.pop %v934
    %v936 = vmul.f32 %v930, %v935
    %s937 = scalar_lea.vmem [#allocation4], 192
    %v938 = vld [vmem:[%s937] sm:$0xff]
    %v939 = vld [vmem:[%s937 + $0x8] sm:$0xff]
    %v940 = vld [vmem:[%s937 + $0x10] sm:$0xff]
    %v941 = vld [vmem:[%s937 + $0x18] sm:$0xff]
    %v942 = vpack.c.bf16 %v936, %v936
    %943 = vmatprep.subr.bf16.mxu0 %v202
    %944 = vmatpush1.bf16.msra.mxu0 %v201
    %945 = vmatprep.subr.bf16.mxu0 %v206
    %946 = vmatpush1.bf16.msra.mxu0 %v205
    %947 = vmatprep.subr.bf16.mxu0 %v210
    %948 = vmatpush1.bf16.msra.mxu0 %v209
    %949 = vmatprep.subr.bf16.mxu0 %v214
    %950 = vmatpush1.bf16.msra.mxu0 %v213
    %951 = vmatprep.subr.bf16.mxu0 %v218
    %952 = vmatpush1.bf16.msra.mxu0 %v217
    %953 = vmatprep.subr.bf16.mxu0 %v222
    %954 = vmatpush1.bf16.msra.mxu0 %v221
    %955 = vmatprep.subr.bf16.mxu0 %v226
    %956 = vmatpush1.bf16.msra.mxu0 %v225
    %957 = vmatprep.subr.bf16.mxu0 %v230
    %958 = vmatpush1.bf16.msra.mxu0 %v229
    %959 = vmatprep.subr.bf16.mxu0 0
    %960 = vmatpush1.bf16.msra.mxu0 0
    %961 = vmatprep.subr.bf16.mxu0 0
    %962 = vmatpush1.bf16.msra.mxu0 0
    %963 = vmatprep.subr.bf16.mxu0 0
    %964 = vmatpush1.bf16.msra.mxu0 0
    %965 = vmatprep.subr.bf16.mxu0 0
    %966 = vmatpush1.bf16.msra.mxu0 0
    %967 = vmatprep.subr.bf16.mxu0 0
    %968 = vmatpush1.bf16.msra.mxu0 0
    %969 = vmatprep.subr.bf16.mxu0 0
    %970 = vmatpush1.bf16.msra.mxu0 0
    %971 = vmatprep.subr.bf16.mxu0 0
    %972 = vmatpush1.bf16.msra.mxu0 0
    %973 = vmatprep.subr.bf16.mxu0 0
    %974 = vmatpush1.bf16.msra.mxu0 0
    %975 = vmatprep.mubr.bf16.mxu0 0
    %976 = vmatmul.mubr.bf16.gmra.mrb[0].mxu0 %v942
    %v977 = vpop.f32.mrb[0].mxu0
    %v978 = vadd.f32 0.0, %v977
    %v979 = vpop.f32.mrb[0].mxu0
    %v980 = vadd.f32 0.0, %v979
    %v981 = vpop.f32.mrb[0].mxu0
    %v982 = vpop.f32.mrb[0].mxu0
    %983 = vdwg.mxu0
    %984 = vmatprep.subr.bf16.mxu0 %v204
    %985 = vmatpush1.bf16.msra.mxu0 %v203
    %986 = vmatprep.subr.bf16.mxu0 %v208
    %987 = vmatpush1.bf16.msra.mxu0 %v207
    %988 = vmatprep.subr.bf16.mxu0 %v212
    %989 = vmatpush1.bf16.msra.mxu0 %v211
    %990 = vmatprep.subr.bf16.mxu0 %v216
    %991 = vmatpush1.bf16.msra.mxu0 %v215
    %992 = vmatprep.subr.bf16.mxu0 %v220
    %993 = vmatpush1.bf16.msra.mxu0 %v219
    %994 = vmatprep.subr.bf16.mxu0 %v224
    %995 = vmatpush1.bf16.msra.mxu0 %v223
    %996 = vmatprep.subr.bf16.mxu0 %v228
    %997 = vmatpush1.bf16.msra.mxu0 %v227
    %998 = vmatprep.subr.bf16.mxu0 %v232
    %999 = vmatpush1.bf16.msra.mxu0 %v231
    %1000 = vmatprep.subr.bf16.mxu0 0
    %1001 = vmatpush1.bf16.msra.mxu0 0
    %1002 = vmatprep.subr.bf16.mxu0 0
    %1003 = vmatpush1.bf16.msra.mxu0 0
    %1004 = vmatprep.subr.bf16.mxu0 0
    %1005 = vmatpush1.bf16.msra.mxu0 0
    %1006 = vmatprep.subr.bf16.mxu0 0
    %1007 = vmatpush1.bf16.msra.mxu0 0
    %1008 = vmatprep.subr.bf16.mxu0 0
    %1009 = vmatpush1.bf16.msra.mxu0 0
    %1010 = vmatprep.subr.bf16.mxu0 0
    %1011 = vmatpush1.bf16.msra.mxu0 0
    %1012 = vmatprep.subr.bf16.mxu0 0
    %1013 = vmatpush1.bf16.msra.mxu0 0
    %1014 = vmatprep.subr.bf16.mxu0 0
    %1015 = vmatpush1.bf16.msra.mxu0 0
    %1016 = vmatprep.mubr.bf16.mxu0 0
    %1017 = vmatmul.mubr.bf16.gmra.mrb[0].mxu0 %v942
    %v1018 = vpop.f32.mrb[0].mxu0
    %v1019 = vadd.f32 0.0, %v1018
    %v1020 = vpop.f32.mrb[0].mxu0
    %v1021 = vadd.f32 0.0, %v1020
    %v1022 = vpop.f32.mrb[0].mxu0
    %v1023 = vpop.f32.mrb[0].mxu0
    %1024 = vdwg.mxu0
    %v1025 = vadd.f32 %v938, %v978
    %v1026 = vadd.f32 %v939, %v980
    %v1027 = vadd.f32 %v940, %v1019
    %v1028 = vadd.f32 %v941, %v1021
    %v1029 = vsub.f32 0.0, %v1025
    %v1030 = vsub.f32 0.0, %v1026
    %v1031 = vsub.f32 0.0, %v1027
    %v1032 = vmul.f32 %v1029, 1.442695
    %v1033 = vpow.pop %v1032
    %v1034 = vmul.f32 %v1030, 1.442695
    %v1035 = vpow.pop %v1034
    %v1036 = vmul.f32 %v1031, 1.442695
    %v1037 = vpow.pop %v1036
    %v1038 = vadd.f32 %v1033, 1.0
    %v1039 = vadd.f32 %v1035, 1.0
    %v1040 = vadd.f32 %v1037, 1.0
    %v1041 = vrcp.pop %v1038
    %v1042 = vrcp.pop %v1039
    %v1043 = vrcp.pop %v1040
    %v1044 = vtanh.pop %v1028
    %v1045 = vmul.f32 %v1042, %v934
    %v1046 = vmul.f32 %v1041, %v1044
    %v1047 = vadd.f32 %v1045, %v1046
    %v1048 = vtanh.pop %v1047
    %v1049 = vmul.f32 %v1043, %v1048
    %s1050 = scalar_lea.vmem [#allocation4], 224
    %v1051 = vld [vmem:[%s1050] sm:$0xff]
    %v1052 = vld [vmem:[%s1050 + $0x8] sm:$0xff]
    %v1053 = vld [vmem:[%s1050 + $0x10] sm:$0xff]
    %v1054 = vld [vmem:[%s1050 + $0x18] sm:$0xff]
    %v1055 = vpack.c.bf16 %v1049, %v1049
    %1056 = vmatprep.subr.bf16.mxu0 %v202
    %1057 = vmatpush1.bf16.msra.mxu0 %v201
    %1058 = vmatprep.subr.bf16.mxu0 %v206
    %1059 = vmatpush1.bf16.msra.mxu0 %v205
    %1060 = vmatprep.subr.bf16.mxu0 %v210
    %1061 = vmatpush1.bf16.msra.mxu0 %v209
    %1062 = vmatprep.subr.bf16.mxu0 %v214
    %1063 = vmatpush1.bf16.msra.mxu0 %v213
    %1064 = vmatprep.subr.bf16.mxu0 %v218
    %1065 = vmatpush1.bf16.msra.mxu0 %v217
    %1066 = vmatprep.subr.bf16.mxu0 %v222
    %1067 = vmatpush1.bf16.msra.mxu0 %v221
    %1068 = vmatprep.subr.bf16.mxu0 %v226
    %1069 = vmatpush1.bf16.msra.mxu0 %v225
    %1070 = vmatprep.subr.bf16.mxu0 %v230
    %1071 = vmatpush1.bf16.msra.mxu0 %v229
    %1072 = vmatprep.subr.bf16.mxu0 0
    %1073 = vmatpush1.bf16.msra.mxu0 0
    %1074 = vmatprep.subr.bf16.mxu0 0
    %1075 = vmatpush1.bf16.msra.mxu0 0
    %1076 = vmatprep.subr.bf16.mxu0 0
    %1077 = vmatpush1.bf16.msra.mxu0 0
    %1078 = vmatprep.subr.bf16.mxu0 0
    %1079 = vmatpush1.bf16.msra.mxu0 0
    %1080 = vmatprep.subr.bf16.mxu0 0
    %1081 = vmatpush1.bf16.msra.mxu0 0
    %1082 = vmatprep.subr.bf16.mxu0 0
    %1083 = vmatpush1.bf16.msra.mxu0 0
    %1084 = vmatprep.subr.bf16.mxu0 0
    %1085 = vmatpush1.bf16.msra.mxu0 0
    %1086 = vmatprep.subr.bf16.mxu0 0
    %1087 = vmatpush1.bf16.msra.mxu0 0
    %1088 = vmatprep.mubr.bf16.mxu0 0
    %1089 = vmatmul.mubr.bf16.gmra.mrb[0].mxu0 %v1055
    %v1090 = vpop.f32.mrb[0].mxu0
    %v1091 = vadd.f32 0.0, %v1090
    %v1092 = vpop.f32.mrb[0].mxu0
    %v1093 = vadd.f32 0.0, %v1092
    %v1094 = vpop.f32.mrb[0].mxu0
    %v1095 = vpop.f32.mrb[0].mxu0
    %1096 = vdwg.mxu0
    %1097 = vmatprep.subr.bf16.mxu0 %v204
    %1098 = vmatpush1.bf16.msra.mxu0 %v203
    %1099 = vmatprep.subr.bf16.mxu0 %v208
    %1100 = vmatpush1.bf16.msra.mxu0 %v207
    %1101 = vmatprep.subr.bf16.mxu0 %v212
    %1102 = vmatpush1.bf16.msra.mxu0 %v211
    %1103 = vmatprep.subr.bf16.mxu0 %v216
    %1104 = vmatpush1.bf16.msra.mxu0 %v215
    %1105 = vmatprep.subr.bf16.mxu0 %v220
    %1106 = vmatpush1.bf16.msra.mxu0 %v219
    %1107 = vmatprep.subr.bf16.mxu0 %v224
    %1108 = vmatpush1.bf16.msra.mxu0 %v223
    %1109 = vmatprep.subr.bf16.mxu0 %v228
    %1110 = vmatpush1.bf16.msra.mxu0 %v227
    %1111 = vmatprep.subr.bf16.mxu0 %v232
    %1112 = vmatpush1.bf16.msra.mxu0 %v231
    %1113 = vmatprep.subr.bf16.mxu0 0
    %1114 = vmatpush1.bf16.msra.mxu0 0
    %1115 = vmatprep.subr.bf16.mxu0 0
    %1116 = vmatpush1.bf16.msra.mxu0 0
    %1117 = vmatprep.subr.bf16.mxu0 0
    %1118 = vmatpush1.bf16.msra.mxu0 0
    %1119 = vmatprep.subr.bf16.mxu0 0
    %1120 = vmatpush1.bf16.msra.mxu0 0
    %1121 = vmatprep.subr.bf16.mxu0 0
    %1122 = vmatpush1.bf16.msra.mxu0 0
    %1123 = vmatprep.subr.bf16.mxu0 0
    %1124 = vmatpush1.bf16.msra.mxu0 0
    %1125 = vmatprep.subr.bf16.mxu0 0
    %1126 = vmatpush1.bf16.msra.mxu0 0
    %1127 = vmatprep.subr.bf16.mxu0 0
    %1128 = vmatpush1.bf16.msra.mxu0 0
    %1129 = vmatprep.mubr.bf16.mxu0 0
    %1130 = vmatmul.mubr.bf16.gmra.mrb[0].mxu0 %v1055
    %v1131 = vpop.f32.mrb[0].mxu0
    %v1132 = vadd.f32 0.0, %v1131
    %v1133 = vpop.f32.mrb[0].mxu0
    %v1134 = vadd.f32 0.0, %v1133
    %v1135 = vpop.f32.mrb[0].mxu0
    %v1136 = vpop.f32.mrb[0].mxu0
    %1137 = vdwg.mxu0
    %v1138 = vadd.f32 %v1051, %v1091
    %v1139 = vadd.f32 %v1052, %v1093
    %v1140 = vadd.f32 %v1053, %v1132
    %v1141 = vadd.f32 %v1054, %v1134
    %v1142 = vsub.f32 0.0, %v1138
    %v1143 = vsub.f32 0.0, %v1139
    %v1144 = vsub.f32 0.0, %v1140
    %v1145 = vmul.f32 %v1142, 1.442695
    %v1146 = vpow.pop %v1145
    %v1147 = vmul.f32 %v1143, 1.442695
    %v1148 = vpow.pop %v1147
    %v1149 = vmul.f32 %v1144, 1.442695
    %v1150 = vpow.pop %v1149
    %v1151 = vadd.f32 %v1146, 1.0
    %v1152 = vadd.f32 %v1148, 1.0
    %v1153 = vadd.f32 %v1150, 1.0
    %v1154 = vrcp.pop %v1151
    %v1155 = vrcp.pop %v1152
    %v1156 = vrcp.pop %v1153
    %v1157 = vtanh.pop %v1141
    %v1158 = vmul.f32 %v1155, %v1047
    %v1159 = vmul.f32 %v1154, %v1157
    %v1160 = vadd.f32 %v1158, %v1159
    %v1161 = vtanh.pop %v1160
    %v1162 = vmul.f32 %v1156, %v1161
    %1163 = vst [vmem:[#allocation2] sm:$0xff] %v1162
    %1164 = vst [vmem:[#allocation3] sm:$0xff] %v1160
    // Predicated region
    $region34: #{tpu_custom_call.1} parent=1 // pred_check
      %p1165 = pneg %p60
    $region35: #{tpu_custom_call.1} parent=1 // pred_check_branch
      %1167 = sbr.rel (%p1165) target = $region37
    $region36: #{tpu_custom_call.1} parent=1 // pred_region
      %v1168 = vpack.c.bf16 %v1162, %v1162
      %v1169 = vld [vmem:[#allocation9] sm:$0xf]
      %v1170 = vld [vmem:[#allocation9 + $0x4] sm:$0xf]
      %v1171 = vld [vmem:[#allocation9 + $0x8] sm:$0xf]
      %v1172 = vld [vmem:[#allocation9 + $0xc] sm:$0xf]
      %v1173 = vld [vmem:[#allocation9 + $0x10] sm:$0xf]
      %v1174 = vld [vmem:[#allocation9 + $0x14] sm:$0xf]
      %v1175 = vld [vmem:[#allocation9 + $0x18] sm:$0xf]
      %v1176 = vld [vmem:[#allocation9 + $0x1c] sm:$0xf]
      %v1177 = vld [vmem:[#allocation9 + $0x20] sm:$0xf]
      %v1178 = vld [vmem:[#allocation9 + $0x24] sm:$0xf]
      %v1179 = vld [vmem:[#allocation9 + $0x28] sm:$0xf]
      %v1180 = vld [vmem:[#allocation9 + $0x2c] sm:$0xf]
      %v1181 = vld [vmem:[#allocation9 + $0x30] sm:$0xf]
      %v1182 = vld [vmem:[#allocation9 + $0x34] sm:$0xf]
      %v1183 = vld [vmem:[#allocation9 + $0x38] sm:$0xf]
      %v1184 = vld [vmem:[#allocation9 + $0x3c] sm:$0xf]
      %v1185 = vld [vmem:[%s3] sm:$0x1]
      %v1187 = vlaneseq
      %v1188 = vshrl.u32 %v1187, 7
      %v1189 = vsub.s32 0, %v1188
      %v1190 = vrot.slane %v1185, %v1189
      %v1208 = vunpack.c.l.b16 %v1169
      %v1209 = vunpack.c.l.b16 %v1170
      %v1210 = vunpack.c.l.b16 %v1171
      %v1211 = vunpack.c.l.b16 %v1172
      %v1212 = vunpack.c.l.b16 %v1173
      %v1213 = vunpack.c.l.b16 %v1174
      %v1214 = vunpack.c.l.b16 %v1175
      %v1215 = vunpack.c.l.b16 %v1176
      %v1216 = vunpack.c.l.b16 %v1177
      %v1217 = vunpack.c.l.b16 %v1178
      %v1218 = vunpack.c.l.b16 %v1179
      %v1219 = vunpack.c.l.b16 %v1180
      %v1220 = vunpack.c.l.b16 %v1181
      %v1221 = vunpack.c.l.b16 %v1182
      %v1222 = vunpack.c.l.b16 %v1183
      %v1223 = vunpack.c.l.b16 %v1184
      %v1224 = vpack.c.b16 %v1209, %v1208
      %v1225 = vpack.c.b16 %v1211, %v1210
      %v1226 = vpack.c.b16 %v1213, %v1212
      %v1227 = vpack.c.b16 %v1215, %v1214
      %v1228 = vpack.c.b16 %v1217, %v1216
      %v1229 = vpack.c.b16 %v1219, %v1218
      %v1230 = vpack.c.b16 %v1221, %v1220
      %v1231 = vpack.c.b16 %v1223, %v1222
      %1240 = vmatprep.subr.bf16.mxu0 0
      %1241 = vmatpush1.bf16.msra.mxu0 %v1224
      %1242 = vmatprep.subr.bf16.mxu0 0
      %1243 = vmatpush1.bf16.msra.mxu0 %v1225
      %1244 = vmatprep.subr.bf16.mxu0 0
      %1245 = vmatpush1.bf16.msra.mxu0 %v1226
      %1246 = vmatprep.subr.bf16.mxu0 0
      %1247 = vmatpush1.bf16.msra.mxu0 %v1227
      %1248 = vmatprep.subr.bf16.mxu0 0
      %1249 = vmatpush1.bf16.msra.mxu0 %v1228
      %1250 = vmatprep.subr.bf16.mxu0 0
      %1251 = vmatpush1.bf16.msra.mxu0 %v1229
      %1252 = vmatprep.subr.bf16.mxu0 0
      %1253 = vmatpush1.bf16.msra.mxu0 %v1230
      %1254 = vmatprep.subr.bf16.mxu0 0
      %1255 = vmatpush1.bf16.msra.mxu0 %v1231
      %1256 = vmatprep.subr.bf16.mxu0 0
      %1257 = vmatpush1.bf16.msra.mxu0 0
      %1258 = vmatprep.subr.bf16.mxu0 0
      %1259 = vmatpush1.bf16.msra.mxu0 0
      %1260 = vmatprep.subr.bf16.mxu0 0
      %1261 = vmatpush1.bf16.msra.mxu0 0
      %1262 = vmatprep.subr.bf16.mxu0 0
      %1263 = vmatpush1.bf16.msra.mxu0 0
      %1264 = vmatprep.subr.bf16.mxu0 0
      %1265 = vmatpush1.bf16.msra.mxu0 0
      %1266 = vmatprep.subr.bf16.mxu0 0
      %1267 = vmatpush1.bf16.msra.mxu0 0
      %1268 = vmatprep.subr.bf16.mxu0 0
      %1269 = vmatpush1.bf16.msra.mxu0 0
      %1270 = vmatprep.subr.bf16.mxu0 0
      %1271 = vmatpush1.bf16.msra.mxu0 0
      %1272 = vmatprep.mubr.bf16.mxu0 0
      %1273 = vmatmul.mubr.bf16.gmra.mrb[0].mxu0 %v1168
      %v1274 = vpop.f32.mrb[0].mxu0
      %v1275 = vadd.f32 %v1190, %v1274
      %v1276 = vpop.f32.mrb[0].mxu0
      %v1277 = vpop.f32.mrb[0].mxu0
      %v1278 = vpop.f32.mrb[0].mxu0
      %1279 = vdwg.mxu0
      %v1280 = vsub.f32 0.0, %v1275
      %v1281 = vmul.f32 %v1280, 1.442695
      %v1282 = vpow.pop %v1281
      %v1283 = vadd.f32 %v1282, 1.0
      %v1284 = vrcp.pop %v1283
      %1285 = vst [vmem:[#allocation10] sm:$0xff] %v1284
    $region37: #{tpu_custom_call.1} parent=1 // pred_fallthru
      _
    // Predicated region
    $region38: #{tpu_custom_call.1} parent=1 // pred_check
      _
    $region39: #{tpu_custom_call.1} parent=1 // pred_check_branch
      %1287 = sbr.rel (0) target = $region41
    $region40: #{tpu_custom_call.1} parent=1 // pred_region
      %s1289 = ssub.s32 128, 128
      %1290 = vsyncadd [#allocation6], %s1289
      %s1292 = sshll.u32 [#allocation10], 4
      %s1293 = int_to_ptr.vmem [resolvable:$true] %s1292
      %1295 = dma.vmem_to_hbm [thread:$0]  %s1293, 128, %s4, [#allocation6]
    $region41: #{tpu_custom_call.1} parent=1 // pred_fallthru
      _
    // Predicated region
    $region42: #{tpu_custom_call.1} parent=1 // pred_check
      _
    $region43: #{tpu_custom_call.1} parent=1 // pred_check_branch
      %1297 = sbr.rel (0) target = $region45
    $region44: #{tpu_custom_call.1} parent=1 // pred_region
      %1298 = dma.done [#allocation6], 128
    $region45: #{tpu_custom_call.1} parent=1 // pred_fallthru
      _
    %1299 = vsyncpa [#allocation5], 1
    %1300 = vsyncpa [#allocation8], 1
    %1301 = vsyncpa [#allocation6], 1

</llo_original>
